<compile_context>
chip_gen: v5e
topology: v5e:2x2
jax: 0.10.0
libtpu: 0.0.40
codegen_flags: <defaults>
</compile_context>

<pallas_src>
import jax
import jax.numpy as jnp
from jax import lax
from jax.experimental import pallas as pl
from jax.experimental.pallas import tpu as pltpu


# Set to jnp.bfloat16 for v6e/v7x (2x MXU rate, f32 accumulation); loosen the
# reference tolerance to ~1e-2 if you do.
MATMUL_DTYPE = jnp.float32


def _round_up(x, m):
    return ((x + m - 1) // m) * m


# ---------------------------------------------------------------------------
# Fused Pallas kernel: conv1 + ReLU + conv2 + ReLU, entirely in VMEM
# ---------------------------------------------------------------------------
def _make_fused_kernel(nb, r1, r2, k, compute_dtype):
    def kernel(x_ref, w1b_ref, b1_ref, w2b_ref, b2_ref, o_ref, h1_ref):
        # x_ref  : (nb, r1 + k - 1, W)   zero-padded input rows
        # w1b_ref: (k, W, W1*C1)         conv1 banded weights (one per kernel row)
        # b1_ref : (1, W1*C1)
        # w2b_ref: (k, W1*C1, C2*W2)     conv2 banded weights (one per kernel row)
        # b2_ref : (1, C2*W2)
        # o_ref  : (nb, r2, C2*W2)       rows = (n, h), cols = (c_out, w)
        # h1_ref : (nb, r1, W1*C1)       VMEM scratch for the conv1 activation
        w_in = x_ref.shape[-1]
        m1 = w1b_ref.shape[-1]
        m2 = w2b_ref.shape[-1]

        # ---- conv1:  h1[n, i, j*C1 + c] = relu(b1[c] + sum_kh slab @ band) ----
        acc1 = jnp.zeros((nb * r1, m1), jnp.float32)
        for kh in range(k):
            xs = x_ref[:, kh:kh + r1, :].reshape(nb * r1, w_in)
            acc1 = acc1 + jnp.dot(xs.astype(compute_dtype),
                                  w1b_ref[kh].astype(compute_dtype),
                                  preferred_element_type=jnp.float32)
        h1_ref[...] = jnp.maximum(acc1 + b1_ref[...], 0.0).reshape(nb, r1, m1)

        # ---- conv2:  out[n, h, co*W2 + w] = relu(b2[co] + sum_kh slab @ band) --
        acc2 = jnp.zeros((nb * r2, m2), jnp.float32)
        for kh in range(k):
            hs = h1_ref[:, kh:kh + r2, :].reshape(nb * r2, m1)
            acc2 = acc2 + jnp.dot(hs.astype(compute_dtype),
                                  w2b_ref[kh].astype(compute_dtype),
                                  preferred_element_type=jnp.float32)
        out = jnp.maximum(acc2 + b2_ref[...], 0.0)
        o_ref[...] = out.reshape(nb, r2, m2).astype(o_ref.dtype)

    return kernel


# ---------------------------------------------------------------------------
# Banded weight matrices (wrapper-level, tiny, built once per call)
# ---------------------------------------------------------------------------
def _conv1_bands(w1, w_img):
    # w1: (C1, 1, K, K) torch layout.
    # band[kh][win, j*C1 + c] = w1[c, 0, kh, win - j]   for 0 <= win - j < K
    c1, _, k, _ = w1.shape
    w1_out = w_img - k + 1
    bands = []
    for kh in range(k):
        b = jnp.zeros((w_img, w1_out, c1), w1.dtype)
        for kw in range(k):
            shift = jnp.eye(w_img, w1_out, k=-kw, dtype=w1.dtype)
            b = b + shift[:, :, None] * w1[:, 0, kh, kw][None, None, :]
        bands.append(b.reshape(w_img, w1_out * c1))
    return jnp.stack(bands)                         # (K, W, W1*C1)


def _conv2_bands(w2, w1_out):
    # w2: (C2, C1, K, K) torch layout.
    # band[kh][j*C1 + ci, co*W2 + w] = w2[co, ci, kh, j - w]   for 0 <= j - w < K
    c2, c1, k, _ = w2.shape
    w2_out = w1_out - k + 1
    bands = []
    for kh in range(k):
        b = jnp.zeros((w1_out, c1, c2, w2_out), w2.dtype)
        for kw in range(k):
            shift = jnp.eye(w1_out, w2_out, k=-kw, dtype=w2.dtype)
            b = b + (shift[:, None, None, :] *
                     w2[:, :, kh, kw].T[None, :, :, None])
        bands.append(b.reshape(w1_out * c1, c2 * w2_out))
    return jnp.stack(bands)                         # (K, W1*C1, C2*W2)


# ---------------------------------------------------------------------------
# Wrapper: pad / build bands / single pallas_call / final flatten permute
# ---------------------------------------------------------------------------
def conv_preprocessing_forward(x, params, batch_block=4):
    """x: (N, 1, H, W) -> (N, 32*(H-8)*(W-8)), same as the torch module."""
    w1, b1, w2, b2 = params
    n, c_in, h_img, w_img = x.shape
    assert c_in == 1
    c1, _, k, _ = w1.shape
    c2 = w2.shape[0]
    h1o, w1o = h_img - k + 1, w_img - k + 1         # conv1 output spatial
    h2o, w2o = h1o - k + 1, w1o - k + 1             # conv2 output spatial

    # sublane-aligned row-slab sizes for the in-kernel matmuls
    r2 = _round_up(h2o, 8)
    r1 = _round_up(max(h1o, r2 + k - 1), 8)
    h_pad = r1 + k - 1

    nb = min(batch_block, n)
    n_pad = pl.cdiv(n, nb) * nb

    # banded weights + tiled biases
    w1b = _conv1_bands(w1, w_img)                    # (K, W, W1*C1)
    w2b = _conv2_bands(w2, w1o)                      # (K, W1*C1, C2*W2)
    b1r = jnp.tile(b1, w1o).reshape(1, w1o * c1)     # col j*C1 + c  -> b1[c]
    b2r = jnp.repeat(b2, w2o).reshape(1, c2 * w2o)   # col co*W2 + w -> b2[co]

    # drop the singleton channel; zero-pad rows and batch
    xw = x.reshape(n, h_img, w_img)
    xw = jnp.pad(xw, ((0, n_pad - n), (0, h_pad - h_img), (0, 0)))

    m1 = w1o * c1
    m2 = c2 * w2o
    out = pl.pallas_call(
        _make_fused_kernel(nb, r1, r2, k, MATMUL_DTYPE),
        out_shape=jax.ShapeDtypeStruct((n_pad, r2, m2), x.dtype),
        grid=(n_pad // nb,),
        in_specs=[
            pl.BlockSpec((nb, h_pad, w_img), lambda g: (g, 0, 0)),
            pl.BlockSpec((k, w_img, m1), lambda g: (0, 0, 0)),
            pl.BlockSpec((1, m1), lambda g: (0, 0)),
            pl.BlockSpec((k, m1, m2), lambda g: (0, 0, 0)),
            pl.BlockSpec((1, m2), lambda g: (0, 0)),
        ],
        out_specs=pl.BlockSpec((nb, r2, m2), lambda g: (g, 0, 0)),
        scratch_shapes=[pltpu.VMEM((nb, r1, m1), jnp.float32)],
        compiler_params=pltpu.CompilerParams(
            dimension_semantics=("parallel",)),
    )(xw, w1b, b1r, w2b, b2r)

    # (n, h, co*W2 + w)  ->  torch NCHW flatten order (co, h, w)
    out = out[:n, :h2o, :].reshape(n, h2o, c2, w2o)
    return out.transpose(0, 2, 1, 3).reshape(n, c2 * h2o * w2o)


# ---------------------------------------------------------------------------
# Deterministic parameter init (PyTorch Conv2d default: U(-1/sqrt(fan_in), +))
# ---------------------------------------------------------------------------
def init_params(key):
    def conv_params(key, cout, cin, k):
        kw_key, kb_key = jax.random.split(key)
        bound = 1.0 / jnp.sqrt(cin * k * k)
        w = jax.random.uniform(kw_key, (cout, cin, k, k), jnp.float32, -bound, bound)
        b = jax.random.uniform(kb_key, (cout,), jnp.float32, -bound, bound)
        return w, b

    k1, k2 = jax.random.split(key)
    w1, b1 = conv_params(k1, 16, 1, 5)
    w2, b2 = conv_params(k2, 32, 16, 5)
    return w1, b1, w2, b2


# ---------------------------------------------------------------------------
# Pure-JAX reference (lax conv) for the correctness check
# ---------------------------------------------------------------------------
def _ref_forward(x, params):
    w1, b1, w2, b2 = params

    def conv(x, w, b):
        y = lax.conv_general_dilated(
            x, w, window_strides=(1, 1), padding="VALID",
            dimension_numbers=("NCHW", "OIHW", "NCHW"),
            precision=lax.Precision.HIGHEST)
        return jax.nn.relu(y + b.reshape(1, -1, 1, 1))

    h = conv(x, w1, b1)
    h = conv(h, w2, b2)
    return h.reshape(x.shape[0], -1)


if __name__ == "__main__":
    key = jax.random.PRNGKey(0)
    k_params, k_x = jax.random.split(key)
    params = init_params(k_params)

    # small MNIST-like single-channel input; batch 8 -> 2 "parallel" grid steps
    x = jax.random.normal(k_x, (8, 1, 16, 16), dtype=jnp.float32)

    fwd = jax.jit(conv_preprocessing_forward)
    out = jax.block_until_ready(fwd(x, params))
    assert out.shape == (8, 32 * 8 * 8), out.shape

    ref = jax.block_until_ready(_ref_forward(x, params))
    assert jnp.allclose(out, ref, atol=1e-3, rtol=1e-3), (
        "mismatch vs reference, max abs err = "
        + str(float(jnp.max(jnp.abs(out - ref)))))

    print("KERNEL_OK")
</pallas_src>

<mosaic_0001>
module attributes {stable_mosaic.version = 11 : i64} {
  func.func @kernel(%arg0: i32, %arg1: memref<4x20x16xf32, #tpu.memory_space<vmem>>, %arg2: memref<5x16x192xf32, #tpu.memory_space<vmem>>, %arg3: memref<1x192xf32, #tpu.memory_space<vmem>>, %arg4: memref<5x192x256xf32, #tpu.memory_space<vmem>>, %arg5: memref<1x256xf32, #tpu.memory_space<vmem>>, %arg6: memref<4x8x256xf32, #tpu.memory_space<vmem>>, %arg7: memref<4x16x192xf32, #tpu.memory_space<vmem>>) attributes {dimension_semantics = [#tpu.dimension_semantics<parallel>], iteration_bounds = array<i64: 2>, scalar_prefetch = 0 : i64, scratch_operands = 1 : i64, tpu.core_type = #tpu.core_type<tc>, window_params = [{transform_indices = @transform_0, window_bounds = array<i64: 4, 20, 16>}, {pipeline_mode = #tpu.pipeline_mode<synchronous>, transform_indices = @transform_1, window_bounds = array<i64: 5, 16, 192>}, {pipeline_mode = #tpu.pipeline_mode<synchronous>, transform_indices = @transform_2, window_bounds = array<i64: 1, 192>}, {pipeline_mode = #tpu.pipeline_mode<synchronous>, transform_indices = @transform_3, window_bounds = array<i64: 5, 192, 256>}, {pipeline_mode = #tpu.pipeline_mode<synchronous>, transform_indices = @transform_4, window_bounds = array<i64: 1, 256>}, {transform_indices = @transform_5, window_bounds = array<i64: 4, 8, 256>}]} {
    %cst = arith.constant 0.000000e+00 : f32
    %0 = vector.broadcast %cst : f32 to vector<64x192xf32>
    %c0 = arith.constant 0 : index
    %c0_0 = arith.constant 0 : index
    %c0_1 = arith.constant 0 : index
    %1 = vector.load %arg1[%c0, %c0_0, %c0_1] : memref<4x20x16xf32, #tpu.memory_space<vmem>>, vector<4x16x16xf32>
    %2 = vector.shape_cast %1 : vector<4x16x16xf32> to vector<64x16xf32>
    %c0_2 = arith.constant 0 : index
    %c0_3 = arith.constant 0 : index
    %c0_4 = arith.constant 0 : index
    %3 = vector.load %arg2[%c0_2, %c0_3, %c0_4] : memref<5x16x192xf32, #tpu.memory_space<vmem>>, vector<1x16x192xf32>
    %4 = vector.shape_cast %3 : vector<1x16x192xf32> to vector<16x192xf32>
    %cst_5 = arith.constant dense<0.000000e+00> : vector<64x192xf32>
    %5 = tpu.matmul %2, %4, %cst_5 {dimension_numbers = #tpu.dot_dimension_numbers<[1], [0], [0], [1], [0, 0, 1, 1], [], []>} : vector<64x16xf32>, vector<16x192xf32>, vector<64x192xf32> -> vector<64x192xf32>
    %6 = arith.addf %0, %5 : vector<64x192xf32>
    %c0_6 = arith.constant 0 : index
    %c1 = arith.constant 1 : index
    %c0_7 = arith.constant 0 : index
    %7 = vector.load %arg1[%c0_6, %c1, %c0_7] : memref<4x20x16xf32, #tpu.memory_space<vmem>>, vector<4x16x16xf32>
    %8 = vector.shape_cast %7 : vector<4x16x16xf32> to vector<64x16xf32>
    %c1_8 = arith.constant 1 : index
    %c0_9 = arith.constant 0 : index
    %c0_10 = arith.constant 0 : index
    %9 = vector.load %arg2[%c1_8, %c0_9, %c0_10] : memref<5x16x192xf32, #tpu.memory_space<vmem>>, vector<1x16x192xf32>
    %10 = vector.shape_cast %9 : vector<1x16x192xf32> to vector<16x192xf32>
    %cst_11 = arith.constant dense<0.000000e+00> : vector<64x192xf32>
    %11 = tpu.matmul %8, %10, %cst_11 {dimension_numbers = #tpu.dot_dimension_numbers<[1], [0], [0], [1], [0, 0, 1, 1], [], []>} : vector<64x16xf32>, vector<16x192xf32>, vector<64x192xf32> -> vector<64x192xf32>
    %12 = arith.addf %6, %11 : vector<64x192xf32>
    %c0_12 = arith.constant 0 : index
    %c2 = arith.constant 2 : index
    %c0_13 = arith.constant 0 : index
    %13 = vector.load %arg1[%c0_12, %c2, %c0_13] : memref<4x20x16xf32, #tpu.memory_space<vmem>>, vector<4x16x16xf32>
    %14 = vector.shape_cast %13 : vector<4x16x16xf32> to vector<64x16xf32>
    %c2_14 = arith.constant 2 : index
    %c0_15 = arith.constant 0 : index
    %c0_16 = arith.constant 0 : index
    %15 = vector.load %arg2[%c2_14, %c0_15, %c0_16] : memref<5x16x192xf32, #tpu.memory_space<vmem>>, vector<1x16x192xf32>
    %16 = vector.shape_cast %15 : vector<1x16x192xf32> to vector<16x192xf32>
    %cst_17 = arith.constant dense<0.000000e+00> : vector<64x192xf32>
    %17 = tpu.matmul %14, %16, %cst_17 {dimension_numbers = #tpu.dot_dimension_numbers<[1], [0], [0], [1], [0, 0, 1, 1], [], []>} : vector<64x16xf32>, vector<16x192xf32>, vector<64x192xf32> -> vector<64x192xf32>
    %18 = arith.addf %12, %17 : vector<64x192xf32>
    %c0_18 = arith.constant 0 : index
    %c3 = arith.constant 3 : index
    %c0_19 = arith.constant 0 : index
    %19 = vector.load %arg1[%c0_18, %c3, %c0_19] : memref<4x20x16xf32, #tpu.memory_space<vmem>>, vector<4x16x16xf32>
    %20 = vector.shape_cast %19 : vector<4x16x16xf32> to vector<64x16xf32>
    %c3_20 = arith.constant 3 : index
    %c0_21 = arith.constant 0 : index
    %c0_22 = arith.constant 0 : index
    %21 = vector.load %arg2[%c3_20, %c0_21, %c0_22] : memref<5x16x192xf32, #tpu.memory_space<vmem>>, vector<1x16x192xf32>
    %22 = vector.shape_cast %21 : vector<1x16x192xf32> to vector<16x192xf32>
    %cst_23 = arith.constant dense<0.000000e+00> : vector<64x192xf32>
    %23 = tpu.matmul %20, %22, %cst_23 {dimension_numbers = #tpu.dot_dimension_numbers<[1], [0], [0], [1], [0, 0, 1, 1], [], []>} : vector<64x16xf32>, vector<16x192xf32>, vector<64x192xf32> -> vector<64x192xf32>
    %24 = arith.addf %18, %23 : vector<64x192xf32>
    %c0_24 = arith.constant 0 : index
    %c4 = arith.constant 4 : index
    %c0_25 = arith.constant 0 : index
    %25 = vector.load %arg1[%c0_24, %c4, %c0_25] : memref<4x20x16xf32, #tpu.memory_space<vmem>>, vector<4x16x16xf32>
    %26 = vector.shape_cast %25 : vector<4x16x16xf32> to vector<64x16xf32>
    %c4_26 = arith.constant 4 : index
    %c0_27 = arith.constant 0 : index
    %c0_28 = arith.constant 0 : index
    %27 = vector.load %arg2[%c4_26, %c0_27, %c0_28] : memref<5x16x192xf32, #tpu.memory_space<vmem>>, vector<1x16x192xf32>
    %28 = vector.shape_cast %27 : vector<1x16x192xf32> to vector<16x192xf32>
    %cst_29 = arith.constant dense<0.000000e+00> : vector<64x192xf32>
    %29 = tpu.matmul %26, %28, %cst_29 {dimension_numbers = #tpu.dot_dimension_numbers<[1], [0], [0], [1], [0, 0, 1, 1], [], []>} : vector<64x16xf32>, vector<16x192xf32>, vector<64x192xf32> -> vector<64x192xf32>
    %30 = arith.addf %24, %29 : vector<64x192xf32>
    %c0_30 = arith.constant 0 : index
    %c0_31 = arith.constant 0 : index
    %31 = vector.load %arg3[%c0_30, %c0_31] : memref<1x192xf32, #tpu.memory_space<vmem>>, vector<1x192xf32>
    %32 = vector.broadcast %31 : vector<1x192xf32> to vector<64x192xf32>
    %33 = arith.addf %30, %32 : vector<64x192xf32>
    %cst_32 = arith.constant 0.000000e+00 : f32
    %34 = vector.broadcast %cst_32 : f32 to vector<64x192xf32>
    %35 = arith.maximumf %33, %34 : vector<64x192xf32>
    %36 = vector.shape_cast %35 : vector<64x192xf32> to vector<4x16x192xf32>
    %c0_33 = arith.constant 0 : index
    %c0_34 = arith.constant 0 : index
    %c0_35 = arith.constant 0 : index
    %37 = vector.load %arg7[%c0_33, %c0_34, %c0_35] : memref<4x16x192xf32, #tpu.memory_space<vmem>>, vector<4x16x192xf32>
    tpu.vector_store %arg7[%c0_33, %c0_34, %c0_35], %36 {strides = array<i32>} : memref<4x16x192xf32, #tpu.memory_space<vmem>>, vector<4x16x192xf32>,
    %cst_36 = arith.constant 0.000000e+00 : f32
    %38 = vector.broadcast %cst_36 : f32 to vector<32x256xf32>
    %c0_37 = arith.constant 0 : index
    %c0_38 = arith.constant 0 : index
    %c0_39 = arith.constant 0 : index
    %39 = vector.load %arg7[%c0_37, %c0_38, %c0_39] : memref<4x16x192xf32, #tpu.memory_space<vmem>>, vector<4x8x192xf32>
    %40 = vector.shape_cast %39 : vector<4x8x192xf32> to vector<32x192xf32>
    %c0_40 = arith.constant 0 : index
    %c0_41 = arith.constant 0 : index
    %c0_42 = arith.constant 0 : index
    %41 = vector.load %arg4[%c0_40, %c0_41, %c0_42] : memref<5x192x256xf32, #tpu.memory_space<vmem>>, vector<1x192x256xf32>
    %42 = vector.shape_cast %41 : vector<1x192x256xf32> to vector<192x256xf32>
    %cst_43 = arith.constant dense<0.000000e+00> : vector<32x256xf32>
    %43 = tpu.matmul %40, %42, %cst_43 {dimension_numbers = #tpu.dot_dimension_numbers<[1], [0], [0], [1], [0, 0, 1, 1], [], []>} : vector<32x192xf32>, vector<192x256xf32>, vector<32x256xf32> -> vector<32x256xf32>
    %44 = arith.addf %38, %43 : vector<32x256xf32>
    %c0_44 = arith.constant 0 : index
    %c1_45 = arith.constant 1 : index
    %c0_46 = arith.constant 0 : index
    %45 = vector.load %arg7[%c0_44, %c1_45, %c0_46] : memref<4x16x192xf32, #tpu.memory_space<vmem>>, vector<4x8x192xf32>
    %46 = vector.shape_cast %45 : vector<4x8x192xf32> to vector<32x192xf32>
    %c1_47 = arith.constant 1 : index
    %c0_48 = arith.constant 0 : index
    %c0_49 = arith.constant 0 : index
    %47 = vector.load %arg4[%c1_47, %c0_48, %c0_49] : memref<5x192x256xf32, #tpu.memory_space<vmem>>, vector<1x192x256xf32>
    %48 = vector.shape_cast %47 : vector<1x192x256xf32> to vector<192x256xf32>
    %cst_50 = arith.constant dense<0.000000e+00> : vector<32x256xf32>
    %49 = tpu.matmul %46, %48, %cst_50 {dimension_numbers = #tpu.dot_dimension_numbers<[1], [0], [0], [1], [0, 0, 1, 1], [], []>} : vector<32x192xf32>, vector<192x256xf32>, vector<32x256xf32> -> vector<32x256xf32>
    %50 = arith.addf %44, %49 : vector<32x256xf32>
    %c0_51 = arith.constant 0 : index
    %c2_52 = arith.constant 2 : index
    %c0_53 = arith.constant 0 : index
    %51 = vector.load %arg7[%c0_51, %c2_52, %c0_53] : memref<4x16x192xf32, #tpu.memory_space<vmem>>, vector<4x8x192xf32>
    %52 = vector.shape_cast %51 : vector<4x8x192xf32> to vector<32x192xf32>
    %c2_54 = arith.constant 2 : index
    %c0_55 = arith.constant 0 : index
    %c0_56 = arith.constant 0 : index
    %53 = vector.load %arg4[%c2_54, %c0_55, %c0_56] : memref<5x192x256xf32, #tpu.memory_space<vmem>>, vector<1x192x256xf32>
    %54 = vector.shape_cast %53 : vector<1x192x256xf32> to vector<192x256xf32>
    %cst_57 = arith.constant dense<0.000000e+00> : vector<32x256xf32>
    %55 = tpu.matmul %52, %54, %cst_57 {dimension_numbers = #tpu.dot_dimension_numbers<[1], [0], [0], [1], [0, 0, 1, 1], [], []>} : vector<32x192xf32>, vector<192x256xf32>, vector<32x256xf32> -> vector<32x256xf32>
    %56 = arith.addf %50, %55 : vector<32x256xf32>
    %c0_58 = arith.constant 0 : index
    %c3_59 = arith.constant 3 : index
    %c0_60 = arith.constant 0 : index
    %57 = vector.load %arg7[%c0_58, %c3_59, %c0_60] : memref<4x16x192xf32, #tpu.memory_space<vmem>>, vector<4x8x192xf32>
    %58 = vector.shape_cast %57 : vector<4x8x192xf32> to vector<32x192xf32>
    %c3_61 = arith.constant 3 : index
    %c0_62 = arith.constant 0 : index
    %c0_63 = arith.constant 0 : index
    %59 = vector.load %arg4[%c3_61, %c0_62, %c0_63] : memref<5x192x256xf32, #tpu.memory_space<vmem>>, vector<1x192x256xf32>
    %60 = vector.shape_cast %59 : vector<1x192x256xf32> to vector<192x256xf32>
    %cst_64 = arith.constant dense<0.000000e+00> : vector<32x256xf32>
    %61 = tpu.matmul %58, %60, %cst_64 {dimension_numbers = #tpu.dot_dimension_numbers<[1], [0], [0], [1], [0, 0, 1, 1], [], []>} : vector<32x192xf32>, vector<192x256xf32>, vector<32x256xf32> -> vector<32x256xf32>
    %62 = arith.addf %56, %61 : vector<32x256xf32>
    %c0_65 = arith.constant 0 : index
    %c4_66 = arith.constant 4 : index
    %c0_67 = arith.constant 0 : index
    %63 = vector.load %arg7[%c0_65, %c4_66, %c0_67] : memref<4x16x192xf32, #tpu.memory_space<vmem>>, vector<4x8x192xf32>
    %64 = vector.shape_cast %63 : vector<4x8x192xf32> to vector<32x192xf32>
    %c4_68 = arith.constant 4 : index
    %c0_69 = arith.constant 0 : index
    %c0_70 = arith.constant 0 : index
    %65 = vector.load %arg4[%c4_68, %c0_69, %c0_70] : memref<5x192x256xf32, #tpu.memory_space<vmem>>, vector<1x192x256xf32>
    %66 = vector.shape_cast %65 : vector<1x192x256xf32> to vector<192x256xf32>
    %cst_71 = arith.constant dense<0.000000e+00> : vector<32x256xf32>
    %67 = tpu.matmul %64, %66, %cst_71 {dimension_numbers = #tpu.dot_dimension_numbers<[1], [0], [0], [1], [0, 0, 1, 1], [], []>} : vector<32x192xf32>, vector<192x256xf32>, vector<32x256xf32> -> vector<32x256xf32>
    %68 = arith.addf %62, %67 : vector<32x256xf32>
    %c0_72 = arith.constant 0 : index
    %c0_73 = arith.constant 0 : index
    %69 = vector.load %arg5[%c0_72, %c0_73] : memref<1x256xf32, #tpu.memory_space<vmem>>, vector<1x256xf32>
    %70 = vector.broadcast %69 : vector<1x256xf32> to vector<32x256xf32>
    %71 = arith.addf %68, %70 : vector<32x256xf32>
    %cst_74 = arith.constant 0.000000e+00 : f32
    %72 = vector.broadcast %cst_74 : f32 to vector<32x256xf32>
    %73 = arith.maximumf %71, %72 : vector<32x256xf32>
    %74 = vector.shape_cast %73 : vector<32x256xf32> to vector<4x8x256xf32>
    %c0_75 = arith.constant 0 : index
    %c0_76 = arith.constant 0 : index
    %c0_77 = arith.constant 0 : index
    %75 = vector.load %arg6[%c0_75, %c0_76, %c0_77] : memref<4x8x256xf32, #tpu.memory_space<vmem>>, vector<4x8x256xf32>
    tpu.vector_store %arg6[%c0_75, %c0_76, %c0_77], %74 {strides = array<i32>} : memref<4x8x256xf32, #tpu.memory_space<vmem>>, vector<4x8x256xf32>,
    return
  }
  func.func @transform_0(%arg0: i32) -> (i32, i32, i32) {
    %c0_i32 = arith.constant 0 : i32
    %c0_i32_0 = arith.constant 0 : i32
    %c0_i32_1 = arith.constant 0 : i32
    return %arg0, %c0_i32, %c0_i32_0 : i32, i32, i32
  }
  func.func @transform_1(%arg0: i32) -> (i32, i32, i32) {
    %c0_i32 = arith.constant 0 : i32
    %c0_i32_0 = arith.constant 0 : i32
    %c0_i32_1 = arith.constant 0 : i32
    %c0_i32_2 = arith.constant 0 : i32
    return %c0_i32, %c0_i32_0, %c0_i32_1 : i32, i32, i32
  }
  func.func @transform_2(%arg0: i32) -> (i32, i32) {
    %c0_i32 = arith.constant 0 : i32
    %c0_i32_0 = arith.constant 0 : i32
    %c0_i32_1 = arith.constant 0 : i32
    return %c0_i32, %c0_i32_0 : i32, i32
  }
  func.func @transform_3(%arg0: i32) -> (i32, i32, i32) {
    %c0_i32 = arith.constant 0 : i32
    %c0_i32_0 = arith.constant 0 : i32
    %c0_i32_1 = arith.constant 0 : i32
    %c0_i32_2 = arith.constant 0 : i32
    return %c0_i32, %c0_i32_0, %c0_i32_1 : i32, i32, i32
  }
  func.func @transform_4(%arg0: i32) -> (i32, i32) {
    %c0_i32 = arith.constant 0 : i32
    %c0_i32_0 = arith.constant 0 : i32
    %c0_i32_1 = arith.constant 0 : i32
    return %c0_i32, %c0_i32_0 : i32, i32
  }
  func.func @transform_5(%arg0: i32) -> (i32, i32, i32) {
    %c0_i32 = arith.constant 0 : i32
    %c0_i32_0 = arith.constant 0 : i32
    %c0_i32_1 = arith.constant 0 : i32
    return %arg0, %c0_i32, %c0_i32_0 : i32, i32, i32
  }
}

</mosaic_0001>

<llo_original>
// kernel: tile.9
$region0: #{tile.9}
  %s0 = inlined_call_operand.vmem [shape: f32[12,16], index: 0, kind: input, shape index: {}]
  %s1 = inlined_call_operand.vmem [shape: f32[1,192], index: 1, kind: output, shape index: {}]
  $region1: #{tile.9} parent=0
    #allocation0 [shape = 'u8[8192]{0}', space=vmem, size = 0x2000, scoped, tag = 'scoped mem for output reshape']
    %s2 = smov 3
    %v3 = vld [vmem:[%s0] ss:$8 sm:%s2]
    %vm4 = vcmask 130048
    %5 = vst.msk [vmem:[#allocation0] ss:$8 sm:$0x3] %vm4, %v3
    %s6 = scalar_lea.vmem %s0, 7
    %v7 = vld [vmem:[%s6] sm:$0x1]
    %8 = vrot.lane.b32.xlu0 %v7, 112
    %v9 = vpop.permute.xlu0 %8
    %vm10 = vcmask 1048448
    %11 = vst.msk [vmem:[#allocation0] sm:$0x1] %vm10, %v9
    %s12 = scalar_lea.vmem %s0, 6
    %v13 = vld [vmem:[%s12] sm:$0x1]
    %14 = vrot.lane.b32.xlu0 %v13, 96
    %v15 = vpop.permute.xlu0 %14
    %vm16 = vcmask 917248
    %17 = vst.msk [vmem:[#allocation0] sm:$0x1] %vm16, %v15
    %s18 = scalar_lea.vmem %s0, 5
    %v19 = vld [vmem:[%s18] sm:$0x1]
    %20 = vrot.lane.b32.xlu0 %v19, 80
    %v21 = vpop.permute.xlu0 %20
    %vm22 = vcmask 786048
    %23 = vst.msk [vmem:[#allocation0] sm:$0x1] %vm22, %v21
    %s24 = scalar_lea.vmem %s0, 4
    %v25 = vld [vmem:[%s24] sm:$0x1]
    %26 = vrot.lane.b32.xlu0 %v25, 64
    %v27 = vpop.permute.xlu0 %26
    %vm28 = vcmask 654848
    %29 = vst.msk [vmem:[#allocation0] sm:$0x1] %vm28, %v27
    %s30 = scalar_lea.vmem %s0, 3
    %s31 = smov 3
    %v32 = vld [vmem:[%s30] ss:$8 sm:%s31]
    %33 = vrot.lane.b32.xlu0 %v32, 48
    %v34 = vpop.permute.xlu0 %33
    %vm35 = vcmask 523648
    %36 = vst.msk [vmem:[#allocation0] ss:$8 sm:$0x3] %vm35, %v34
    %s37 = scalar_lea.vmem %s0, 2
    %s38 = smov 3
    %v39 = vld [vmem:[%s37] ss:$8 sm:%s38]
    %40 = vrot.lane.b32.xlu0 %v39, 32
    %v41 = vpop.permute.xlu0 %40
    %vm42 = vcmask 392448
    %43 = vst.msk [vmem:[#allocation0] ss:$8 sm:$0x3] %vm42, %v41
    %s44 = scalar_lea.vmem %s0, 1
    %s45 = smov 3
    %v46 = vld [vmem:[%s44] ss:$8 sm:%s45]
    %47 = vrot.lane.b32.xlu0 %v46, 16
    %v48 = vpop.permute.xlu0 %47
    %vm49 = vcmask 261248
    %50 = vst.msk [vmem:[#allocation0] ss:$8 sm:$0x3] %vm49, %v48
    %s52 = ssub.s32 2, 1
    %v53 = vld [vmem:[#allocation0] sm:%s52]
    %s55 = ssub.s32 2, 1
    %56 = vst [vmem:[%s1] sm:%s55] %v53
    %s57 = scalar_lea.vmem [#allocation0], 8
    %v58 = vld [vmem:[%s57] sm:%s52]
    %s60 = ssub.s32 2, 1
    %s61 = scalar_lea.vmem %s1, 1
    %62 = vst [vmem:[%s61] sm:%s60] %v58

// kernel: tile.8
$region0: #{tile.8}
  #allocation2 [shape = 's32[1]{0}', space=sflag, size = 0x4, scoped, tag = 'scoped memory for tile.8']
  %s0 = inlined_call_operand.hbm [shape: f32[16], index: 0, kind: input, shape index: {}]
  %s1 = inlined_call_operand.vmem [shape: f32[12,16], index: 1, kind: output, shape index: {}]
  $region1: #{tile.8} parent=0
    #allocation0 [shape = 'u8[512]{0}', space=vmem, size = 0x400, scoped, tag = 'operand span for operand 0']
    #allocation1 [shape = 's32[1]{0}', space=sflag, size = 0x4, scoped, tag = 'scoped memory for tile.8']
    %2 = vsyncpa [#allocation1], 0
    // Predicated region
    $region2: #{tile.8} parent=1 // pred_check
      _
    $region3: #{tile.8} parent=1 // pred_check_branch
      %4 = sbr.rel (0) target = $region5
    $region4: #{tile.8} parent=1 // pred_region
      %6 = vsyncadd [#allocation1], 0
      %s8 = sshll.u32 %s0, 4
      %s9 = int_to_ptr.hbm [resolvable:$true] %s8
      %s10 = sshll.u32 [#allocation0], 4
      %s11 = int_to_ptr.vmem [resolvable:$true] %s10
      %13 = dma.hbm_to_vmem [thread:$0]  %s9, 16, %s11, [#allocation1]
    $region5: #{tile.8} parent=1 // pred_fallthru
      _
    // Predicated region
    $region6: #{tile.8} parent=1 // pred_check
      _
    $region7: #{tile.8} parent=1 // pred_check_branch
      %15 = sbr.rel (0) target = $region9
    $region8: #{tile.8} parent=1 // pred_region
      %17 = dma.done [#allocation1], 16
    $region9: #{tile.8} parent=1 // pred_fallthru
      _
    %v18 = vld [vmem:[#allocation0] ss:$0 sm:$0xff]
    %19 = vst [vmem:[%s1] sm:$0xff] %v18
    %s20 = scalar_lea.vmem %s1, 8
    %21 = vst [vmem:[%s20] sm:$0xff] %v18
    %22 = vsyncpa [#allocation1], 1

// kernel: conv_preprocessing_forward.1
$region0: #{conv_preprocessing_forward.1}
  #allocation0 [shape = 'u32[]', space=smem, size = 0x4, offset = 0x4, fixed_abs, tag = 'smem constant byte address 0x4 - core index']
  #allocation1 [shape = 'u32[72,128]{1,0:T(1,128)}', space=vmem, size = 0x9000, scoped, tag = 'internal scratch']
  #allocation2 [shape = 'f32[4,16,192]{2,1,0:T(8,128)}', space=vmem, size = 0x10000, scoped, tag = 'scratch operand']
  %s0 = inlined_call_operand.vmem [shape: f32[8,20,16], index: 0, kind: input, shape index: {}]
  %s1 = inlined_call_operand.vmem [shape: f32[5,16,192], index: 1, kind: input, shape index: {}]
  %s2 = inlined_call_operand.vmem [shape: f32[1,192], index: 2, kind: input, shape index: {}]
  %s3 = inlined_call_operand.vmem [shape: f32[5,192,256], index: 3, kind: input, shape index: {}]
  %s4 = inlined_call_operand.vmem [shape: f32[1,256], index: 4, kind: input, shape index: {}]
  %s5 = inlined_call_operand.vmem [shape: f32[8,8,256], index: 5, kind: output, shape index: {}]
  %s6 = sld [smem:[#allocation0]]
  $region53: #{conv_preprocessing_forward.1} parent=0
    _
  %s8 = ssub.s32 1, %s6
  %s9 = scalar_select 0, %s8, %s6
  loop: start=0, step=1, limit=4
  $region2: #{conv_preprocessing_forward.1} parent=0 // loop_pre_header
    _
  $region3: #{conv_preprocessing_forward.1} parent=0 // loop_header
    %s11 = sphi 0, %s15
    %p12 = scmp.ge.s32.totalorder %s11, 4
    %s21 = sphi 0, %s23
    %s24 = sphi 0, %s21
    %s25 = sphi 0, %s24
    %s41 = sphi 0, %s25
    %s45 = sphi 0, %s45
    %s47 = sphi 0, %s45
    %s48 = sphi 0, %s47
    %s62 = sphi 0, %s48
    %s66 = sphi 0, %s66
    %s68 = sphi 0, %s66
    %s69 = sphi 0, %s68
    %s83 = sphi 0, %s69
    %s87 = sphi 0, %s87
    %s89 = sphi 0, %s87
    %s90 = sphi 0, %s89
    %s104 = sphi 0, %s90
    %s108 = sphi 0, %s108
    %s110 = sphi 0, %s108
    %s111 = sphi 0, %s110
    %s125 = sphi 0, %s111
    %s131 = sphi 0, %s133
    %s134 = sphi 0, %s131
    %s135 = sphi 0, %s134
    %s151 = sphi 0, %s135
  $region4: #{conv_preprocessing_forward.1} parent=0 // loop_header_branch
    %14 = sbr.rel (%p12) target = $region8
  $region5: #{conv_preprocessing_forward.1} parent=0 // loop_body
    %s16 = ssub.s32 %s11, 1
    %s17 = ssub.s32 %s11, 2
    %s18 = sadd.s32 %s11, 1
    %s19 = ssub.s32 %s11, %s18
    %p20 = scmp.eq.s32.totalorder %s19, 0
    %s22 = sadd.s32 %s21, 1
    %s23 = scalar_select %p20, %s21, %s22
    %p26 = pneg %p20
    %p27 = scmp.eq.s32.totalorder %s11, 1
    %p28 = por %p26, %p27
    %p29 = scmp.ne.s32.totalorder %s21, %s24
    %p30 = scmp.eq.s32.totalorder %s11, 0
    %p31 = por %p29, %p30
    %p32 = scmp.ne.s32.totalorder %s21, %s24
    %p33 = scmp.eq.s32.totalorder %s16, 1
    %p34 = por %p32, %p33
    %p35 = scmp.ne.s32.totalorder %s24, %s25
    %p36 = scmp.eq.s32.totalorder %s16, 0
    %p37 = por %p35, %p36
    %p38 = scmp.ne.s32.totalorder %s24, %s25
    %p39 = scmp.eq.s32.totalorder %s17, 1
    %p40 = por %p38, %p39
    %p42 = scmp.ne.s32.totalorder %s25, %s41
    %p43 = scmp.eq.s32.totalorder %s17, 0
    %p44 = por %p42, %p43
    %s46 = sadd.s32 %s45, 1
    %p49 = scmp.eq.s32.totalorder %s11, 1
    %p50 = scmp.ne.s32.totalorder %s45, %s47
    %p51 = scmp.eq.s32.totalorder %s11, 0
    %p52 = por %p50, %p51
    %p53 = scmp.ne.s32.totalorder %s45, %s47
    %p54 = scmp.eq.s32.totalorder %s16, 1
    %p55 = por %p53, %p54
    %p56 = scmp.ne.s32.totalorder %s47, %s48
    %p57 = scmp.eq.s32.totalorder %s16, 0
    %p58 = por %p56, %p57
    %p59 = scmp.ne.s32.totalorder %s47, %s48
    %p60 = scmp.eq.s32.totalorder %s17, 1
    %p61 = por %p59, %p60
    %p63 = scmp.ne.s32.totalorder %s48, %s62
    %p64 = scmp.eq.s32.totalorder %s17, 0
    %p65 = por %p63, %p64
    %s67 = sadd.s32 %s66, 1
    %p70 = scmp.eq.s32.totalorder %s11, 1
    %p71 = scmp.ne.s32.totalorder %s66, %s68
    %p72 = scmp.eq.s32.totalorder %s11, 0
    %p73 = por %p71, %p72
    %p74 = scmp.ne.s32.totalorder %s66, %s68
    %p75 = scmp.eq.s32.totalorder %s16, 1
    %p76 = por %p74, %p75
    %p77 = scmp.ne.s32.totalorder %s68, %s69
    %p78 = scmp.eq.s32.totalorder %s16, 0
    %p79 = por %p77, %p78
    %p80 = scmp.ne.s32.totalorder %s68, %s69
    %p81 = scmp.eq.s32.totalorder %s17, 1
    %p82 = por %p80, %p81
    %p84 = scmp.ne.s32.totalorder %s69, %s83
    %p85 = scmp.eq.s32.totalorder %s17, 0
    %p86 = por %p84, %p85
    %s88 = sadd.s32 %s87, 1
    %p91 = scmp.eq.s32.totalorder %s11, 1
    %p92 = scmp.ne.s32.totalorder %s87, %s89
    %p93 = scmp.eq.s32.totalorder %s11, 0
    %p94 = por %p92, %p93
    %p95 = scmp.ne.s32.totalorder %s87, %s89
    %p96 = scmp.eq.s32.totalorder %s16, 1
    %p97 = por %p95, %p96
    %p98 = scmp.ne.s32.totalorder %s89, %s90
    %p99 = scmp.eq.s32.totalorder %s16, 0
    %p100 = por %p98, %p99
    %p101 = scmp.ne.s32.totalorder %s89, %s90
    %p102 = scmp.eq.s32.totalorder %s17, 1
    %p103 = por %p101, %p102
    %p105 = scmp.ne.s32.totalorder %s90, %s104
    %p106 = scmp.eq.s32.totalorder %s17, 0
    %p107 = por %p105, %p106
    %s109 = sadd.s32 %s108, 1
    %p112 = scmp.eq.s32.totalorder %s11, 1
    %p113 = scmp.ne.s32.totalorder %s108, %s110
    %p114 = scmp.eq.s32.totalorder %s11, 0
    %p115 = por %p113, %p114
    %p116 = scmp.ne.s32.totalorder %s108, %s110
    %p117 = scmp.eq.s32.totalorder %s16, 1
    %p118 = por %p116, %p117
    %p119 = scmp.ne.s32.totalorder %s110, %s111
    %p120 = scmp.eq.s32.totalorder %s16, 0
    %p121 = por %p119, %p120
    %p122 = scmp.ne.s32.totalorder %s110, %s111
    %p123 = scmp.eq.s32.totalorder %s17, 1
    %p124 = por %p122, %p123
    %p126 = scmp.ne.s32.totalorder %s111, %s125
    %p127 = scmp.eq.s32.totalorder %s17, 0
    %p128 = por %p126, %p127
    %s129 = ssub.s32 %s11, %s18
    %p130 = scmp.eq.s32.totalorder %s129, 0
    %s132 = sadd.s32 %s131, 1
    %s133 = scalar_select %p130, %s131, %s132
    %p136 = pneg %p130
    %p137 = scmp.eq.s32.totalorder %s11, 1
    %p138 = por %p136, %p137
    %p139 = scmp.ne.s32.totalorder %s131, %s134
    %p140 = scmp.eq.s32.totalorder %s11, 0
    %p141 = por %p139, %p140
    %p142 = scmp.ne.s32.totalorder %s131, %s134
    %p143 = scmp.eq.s32.totalorder %s16, 1
    %p144 = por %p142, %p143
    %p145 = scmp.ne.s32.totalorder %s134, %s135
    %p146 = scmp.eq.s32.totalorder %s16, 0
    %p147 = por %p145, %p146
    %p148 = scmp.ne.s32.totalorder %s134, %s135
    %p149 = scmp.eq.s32.totalorder %s17, 1
    %p150 = por %p148, %p149
    %p152 = scmp.ne.s32.totalorder %s135, %s151
    %p153 = scmp.eq.s32.totalorder %s17, 0
    %p154 = por %p152, %p153
    %p155 = scmp.le.s32.totalorder 1, %s11
    %p156 = scmp.lt.s32.totalorder %s11, 3
    %p157 = pnand %p155, %p156
    %p158 = pneg %p157
    // Predicated region
    $region9: #{conv_preprocessing_forward.1} parent=5 // pred_check
      _
    $region10: #{conv_preprocessing_forward.1} parent=5 // pred_check_branch
      %160 = sbr.rel (%p157) target = $region12
    $region11: #{conv_preprocessing_forward.1} parent=5 // pred_region
      %s161 = ssub.s32 %s11, 1
      // Predicated region
      $region13: #{conv_preprocessing_forward.1} parent=11 // pred_check
        %p162 = pneg %p58
      $region14: #{conv_preprocessing_forward.1} parent=11 // pred_check_branch
        %164 = sbr.rel (%p162) target = $region16
      $region15: #{conv_preprocessing_forward.1} parent=11 // pred_region
        _
      $region16: #{conv_preprocessing_forward.1} parent=11 // pred_fallthru
        _
      // Predicated region
      $region17: #{conv_preprocessing_forward.1} parent=11 // pred_check
        %p165 = pneg %p79
      $region18: #{conv_preprocessing_forward.1} parent=11 // pred_check_branch
        %167 = sbr.rel (%p165) target = $region20
      $region19: #{conv_preprocessing_forward.1} parent=11 // pred_region
        _
      $region20: #{conv_preprocessing_forward.1} parent=11 // pred_fallthru
        _
      // Predicated region
      $region21: #{conv_preprocessing_forward.1} parent=11 // pred_check
        %p168 = pneg %p100
      $region22: #{conv_preprocessing_forward.1} parent=11 // pred_check_branch
        %170 = sbr.rel (%p168) target = $region24
      $region23: #{conv_preprocessing_forward.1} parent=11 // pred_region
        _
      $region24: #{conv_preprocessing_forward.1} parent=11 // pred_fallthru
        _
      // Predicated region
      $region25: #{conv_preprocessing_forward.1} parent=11 // pred_check
        %p171 = pneg %p121
      $region26: #{conv_preprocessing_forward.1} parent=11 // pred_check_branch
        %173 = sbr.rel (%p171) target = $region28
      $region27: #{conv_preprocessing_forward.1} parent=11 // pred_region
        _
      $region28: #{conv_preprocessing_forward.1} parent=11 // pred_fallthru
        _
    $region12: #{conv_preprocessing_forward.1} parent=5 // pred_fallthru
      _
    %p174 = scmp.lt.s32.totalorder %s11, 2
    // Predicated region
    $region29: #{conv_preprocessing_forward.1} parent=5 // pred_check
      %p175 = pneg %p174
    $region30: #{conv_preprocessing_forward.1} parent=5 // pred_check_branch
      %177 = sbr.rel (%p175) target = $region32
    $region31: #{conv_preprocessing_forward.1} parent=5 // pred_region
      // Predicated region
      $region33: #{conv_preprocessing_forward.1} parent=31 // pred_check
        %p178 = pneg %p31
      $region34: #{conv_preprocessing_forward.1} parent=31 // pred_check_branch
        %180 = sbr.rel (%p178) target = $region36
      $region35: #{conv_preprocessing_forward.1} parent=31 // pred_region
        %s181 = smul.u32 4, %s11
        %p182 = scmp.lt.s32.totalorder %s181, 7
        %s183 = scalar_select %p182, %s181, 7
        %s184 = smul.addr %s183, 3
        %s185 = smul.addr %s184, 8
        %s186 = scalar_lea.vmem %s0, %s185
        %s187 = smul.u32 4, %s11
      $region36: #{conv_preprocessing_forward.1} parent=31 // pred_fallthru
        _
    $region32: #{conv_preprocessing_forward.1} parent=5 // pred_fallthru
      _
    %p188 = scmp.le.s32.totalorder 1, %s11
    %p189 = scmp.lt.s32.totalorder %s11, 3
    %p190 = pnand %p188, %p189
    %p191 = pneg %p190
    // Predicated region
    $region37: #{conv_preprocessing_forward.1} parent=5 // pred_check
      _
    $region38: #{conv_preprocessing_forward.1} parent=5 // pred_check_branch
      %193 = sbr.rel (%p190) target = $region40
    $region39: #{conv_preprocessing_forward.1} parent=5 // pred_region
      %s194 = ssub.s32 %s11, 1
      %s195 = smul.u32 4, %s16
      %p196 = scmp.lt.s32.totalorder %s195, 7
      %s197 = scalar_select %p196, %s195, 7
      %s198 = smul.addr %s197, 3
      %s199 = smul.addr %s198, 8
      %s200 = scalar_lea.vmem %s0, %s199
      %p201 = pneg %p37
      %p202 = pneg %p34
      %p203 = pneg %p58
      %p204 = pneg %p55
      %p205 = pneg %p79
      %p206 = pneg %p76
      %p207 = pneg %p100
      %p208 = pneg %p97
      %p209 = pneg %p121
      %p210 = pneg %p118
      %p211 = pneg %p147
      %p212 = pneg %p144
      %s213 = smul.u32 4, %s16
      %p214 = scmp.lt.s32.totalorder %s213, 7
      %s215 = scalar_select %p214, %s213, 7
      %s216 = smul.addr %s215, 2
      %s217 = smul.addr %s216, 8
      %s218 = scalar_lea.vmem %s5, %s217
      %s219 = smul.u32 4, %s16
      %p220 = scmp.lt.s32.totalorder %s219, 7
      %s221 = scalar_select %p220, %s219, 7
      %s222 = smul.addr %s221, 3
      %s223 = smul.addr %s222, 8
      %s224 = scalar_lea.vmem %s0, %s223
      %s225 = smul.u32 4, %s16
      %s226 = smul.u32 4, %s16
      %p227 = scmp.lt.s32.totalorder %s226, 7
      %s228 = scalar_select %p227, %s226, 7
      %s229 = smul.addr %s228, 2
      %s230 = smul.addr %s229, 8
      %s231 = scalar_lea.vmem %s5, %s230
      %s232 = smul.u32 4, %s16
      %v233 = vld [vmem:[%s224] sm:$0xff]
      %v234 = vld [vmem:[%s224 + $0x8] sm:$0xff]
      %v235 = vld [vmem:[%s224 + $0x18] sm:$0xff]
      %v236 = vld [vmem:[%s224 + $0x20] sm:$0xff]
      %v237 = vld [vmem:[%s224 + $0x30] sm:$0xff]
      %v238 = vld [vmem:[%s224 + $0x38] sm:$0xff]
      %v239 = vld [vmem:[%s224 + $0x48] sm:$0xff]
      %v240 = vld [vmem:[%s224 + $0x50] sm:$0xff]
      %v241 = vld [vmem:[%s1] sm:$0xff]
      %v242 = vld [vmem:[%s1 + $0x8] sm:$0xff]
      %v243 = vld [vmem:[%s1 + $0x10] sm:$0xff]
      %v244 = vld [vmem:[%s1 + $0x18] sm:$0xff]
      %v245 = vld [vmem:[%s224 + $0x1] sm:$0xff]
      %v246 = vld [vmem:[%s224 + $0x9] sm:$0xff]
      %v247 = vld [vmem:[%s224 + $0x19] sm:$0xff]
      %v248 = vld [vmem:[%s224 + $0x21] sm:$0xff]
      %v249 = vld [vmem:[%s224 + $0x31] sm:$0xff]
      %v250 = vld [vmem:[%s224 + $0x39] sm:$0xff]
      %v251 = vld [vmem:[%s224 + $0x49] sm:$0xff]
      %v252 = vld [vmem:[%s224 + $0x51] sm:$0xff]
      %s253 = scalar_lea.vmem %s1, 32
      %v254 = vld [vmem:[%s253] sm:$0xff]
      %v255 = vld [vmem:[%s253 + $0x8] sm:$0xff]
      %v256 = vld [vmem:[%s253 + $0x10] sm:$0xff]
      %v257 = vld [vmem:[%s253 + $0x18] sm:$0xff]
      %vm258 = vcmask 130048
      %v260 = vsel %vm258, %v245, 0
      %v263 = vsel %vm258, %v246, 0
      %v266 = vsel %vm258, %v247, 0
      %v269 = vsel %vm258, %v248, 0
      %v272 = vsel %vm258, %v249, 0
      %v275 = vsel %vm258, %v250, 0
      %v278 = vsel %vm258, %v251, 0
      %v281 = vsel %vm258, %v252, 0
      %283 = vmatpush.msra.mxu0 0.0
      %284 = vmatpush.msra.mxu0 0.0
      %285 = vmatpush.msra.mxu0 0.0
      %286 = vmatpush.msra.mxu0 0.0
      %287 = vmatpush.msra.mxu0 0.0
      %288 = vmatpush.msra.mxu0 0.0
      %289 = vmatpush.msra.mxu0 0.0
      %290 = vmatpush.msra.mxu0 0.0
      %291 = vmatpush.msra.mxu0 0.0
      %292 = vmatpush.msra.mxu0 0.0
      %293 = vmatpush.msra.mxu0 0.0
      %294 = vmatpush.msra.mxu0 0.0
      %295 = vmatpush.msra.mxu0 0.0
      %296 = vmatpush.msra.mxu0 0.0
      %297 = vmatpush.msra.mxu0 %v256
      %298 = vmatpush.msra.mxu0 %v254
      %299 = vmatmul.f32.gmra.mxu0 %v260
      %v300 = vpop.f32.mrf.mxu0
      %v301 = vadd.f32 0.0, %v300
      %302 = vmatmul.f32.gmra.mxu0 %v263
      %v303 = vpop.f32.mrf.mxu0
      %v304 = vadd.f32 0.0, %v303
      %305 = vmatmul.f32.gmra.mxu0 %v266
      %v306 = vpop.f32.mrf.mxu0
      %v307 = vadd.f32 0.0, %v306
      %308 = vmatmul.f32.gmra.mxu0 %v269
      %v309 = vpop.f32.mrf.mxu0
      %v310 = vadd.f32 0.0, %v309
      %311 = vmatmul.f32.gmra.mxu0 %v272
      %v312 = vpop.f32.mrf.mxu0
      %v313 = vadd.f32 0.0, %v312
      %314 = vmatmul.f32.gmra.mxu0 %v275
      %v315 = vpop.f32.mrf.mxu0
      %v316 = vadd.f32 0.0, %v315
      %317 = vmatmul.f32.gmra.mxu0 %v278
      %v318 = vpop.f32.mrf.mxu0
      %v319 = vadd.f32 0.0, %v318
      %320 = vmatmul.f32.gmra.mxu0 %v281
      %v321 = vpop.f32.mrf.mxu0
      %v322 = vadd.f32 0.0, %v321
      %323 = vdwg.mxu0
      %324 = vmatpush.msra.mxu0 0.0
      %325 = vmatpush.msra.mxu0 0.0
      %326 = vmatpush.msra.mxu0 0.0
      %327 = vmatpush.msra.mxu0 0.0
      %328 = vmatpush.msra.mxu0 0.0
      %329 = vmatpush.msra.mxu0 0.0
      %330 = vmatpush.msra.mxu0 0.0
      %331 = vmatpush.msra.mxu0 0.0
      %332 = vmatpush.msra.mxu0 0.0
      %333 = vmatpush.msra.mxu0 0.0
      %334 = vmatpush.msra.mxu0 0.0
      %335 = vmatpush.msra.mxu0 0.0
      %336 = vmatpush.msra.mxu0 0.0
      %337 = vmatpush.msra.mxu0 0.0
      %338 = vmatpush.msra.mxu0 %v257
      %339 = vmatpush.msra.mxu0 %v255
      %340 = vmatmul.f32.gmra.mxu0 %v260
      %v341 = vpop.f32.mrf.mxu0
      %v342 = vadd.f32 0.0, %v341
      %343 = vmatmul.f32.gmra.mxu0 %v263
      %v344 = vpop.f32.mrf.mxu0
      %v345 = vadd.f32 0.0, %v344
      %346 = vmatmul.f32.gmra.mxu0 %v266
      %v347 = vpop.f32.mrf.mxu0
      %v348 = vadd.f32 0.0, %v347
      %349 = vmatmul.f32.gmra.mxu0 %v269
      %v350 = vpop.f32.mrf.mxu0
      %v351 = vadd.f32 0.0, %v350
      %352 = vmatmul.f32.gmra.mxu0 %v272
      %v353 = vpop.f32.mrf.mxu0
      %v354 = vadd.f32 0.0, %v353
      %355 = vmatmul.f32.gmra.mxu0 %v275
      %v356 = vpop.f32.mrf.mxu0
      %v357 = vadd.f32 0.0, %v356
      %358 = vmatmul.f32.gmra.mxu0 %v278
      %v359 = vpop.f32.mrf.mxu0
      %v360 = vadd.f32 0.0, %v359
      %361 = vmatmul.f32.gmra.mxu0 %v281
      %v362 = vpop.f32.mrf.mxu0
      %v363 = vadd.f32 0.0, %v362
      %364 = vdwg.mxu0
      %v366 = vsel %vm258, %v233, 0
      %v369 = vsel %vm258, %v234, 0
      %v372 = vsel %vm258, %v235, 0
      %v375 = vsel %vm258, %v236, 0
      %v378 = vsel %vm258, %v237, 0
      %v381 = vsel %vm258, %v238, 0
      %v384 = vsel %vm258, %v239, 0
      %v387 = vsel %vm258, %v240, 0
      %389 = vmatpush.msra.mxu0 0.0
      %390 = vmatpush.msra.mxu0 0.0
      %391 = vmatpush.msra.mxu0 0.0
      %392 = vmatpush.msra.mxu0 0.0
      %393 = vmatpush.msra.mxu0 0.0
      %394 = vmatpush.msra.mxu0 0.0
      %395 = vmatpush.msra.mxu0 0.0
      %396 = vmatpush.msra.mxu0 0.0
      %397 = vmatpush.msra.mxu0 0.0
      %398 = vmatpush.msra.mxu0 0.0
      %399 = vmatpush.msra.mxu0 0.0
      %400 = vmatpush.msra.mxu0 0.0
      %401 = vmatpush.msra.mxu0 0.0
      %402 = vmatpush.msra.mxu0 0.0
      %403 = vmatpush.msra.mxu0 %v243
      %404 = vmatpush.msra.mxu0 %v241
      %405 = vmatmul.f32.gmra.mxu0 %v366
      %v406 = vpop.f32.mrf.mxu0
      %v407 = vadd.f32 %v301, %v406
      %408 = vmatmul.f32.gmra.mxu0 %v369
      %v409 = vpop.f32.mrf.mxu0
      %v410 = vadd.f32 %v304, %v409
      %411 = vmatmul.f32.gmra.mxu0 %v372
      %v412 = vpop.f32.mrf.mxu0
      %v413 = vadd.f32 %v307, %v412
      %414 = vmatmul.f32.gmra.mxu0 %v375
      %v415 = vpop.f32.mrf.mxu0
      %v416 = vadd.f32 %v310, %v415
      %417 = vmatmul.f32.gmra.mxu0 %v378
      %v418 = vpop.f32.mrf.mxu0
      %v419 = vadd.f32 %v313, %v418
      %420 = vmatmul.f32.gmra.mxu0 %v381
      %v421 = vpop.f32.mrf.mxu0
      %v422 = vadd.f32 %v316, %v421
      %423 = vmatmul.f32.gmra.mxu0 %v384
      %v424 = vpop.f32.mrf.mxu0
      %v425 = vadd.f32 %v319, %v424
      %426 = vmatmul.f32.gmra.mxu0 %v387
      %v427 = vpop.f32.mrf.mxu0
      %v428 = vadd.f32 %v322, %v427
      %429 = vdwg.mxu0
      %430 = vmatpush.msra.mxu0 0.0
      %431 = vmatpush.msra.mxu0 0.0
      %432 = vmatpush.msra.mxu0 0.0
      %433 = vmatpush.msra.mxu0 0.0
      %434 = vmatpush.msra.mxu0 0.0
      %435 = vmatpush.msra.mxu0 0.0
      %436 = vmatpush.msra.mxu0 0.0
      %437 = vmatpush.msra.mxu0 0.0
      %438 = vmatpush.msra.mxu0 0.0
      %439 = vmatpush.msra.mxu0 0.0
      %440 = vmatpush.msra.mxu0 0.0
      %441 = vmatpush.msra.mxu0 0.0
      %442 = vmatpush.msra.mxu0 0.0
      %443 = vmatpush.msra.mxu0 0.0
      %444 = vmatpush.msra.mxu0 %v244
      %445 = vmatpush.msra.mxu0 %v242
      %446 = vmatmul.f32.gmra.mxu0 %v366
      %v447 = vpop.f32.mrf.mxu0
      %v448 = vadd.f32 %v342, %v447
      %449 = vmatmul.f32.gmra.mxu0 %v369
      %v450 = vpop.f32.mrf.mxu0
      %v451 = vadd.f32 %v345, %v450
      %452 = vmatmul.f32.gmra.mxu0 %v372
      %v453 = vpop.f32.mrf.mxu0
      %v454 = vadd.f32 %v348, %v453
      %455 = vmatmul.f32.gmra.mxu0 %v375
      %v456 = vpop.f32.mrf.mxu0
      %v457 = vadd.f32 %v351, %v456
      %458 = vmatmul.f32.gmra.mxu0 %v378
      %v459 = vpop.f32.mrf.mxu0
      %v460 = vadd.f32 %v354, %v459
      %461 = vmatmul.f32.gmra.mxu0 %v381
      %v462 = vpop.f32.mrf.mxu0
      %v463 = vadd.f32 %v357, %v462
      %464 = vmatmul.f32.gmra.mxu0 %v384
      %v465 = vpop.f32.mrf.mxu0
      %v466 = vadd.f32 %v360, %v465
      %467 = vmatmul.f32.gmra.mxu0 %v387
      %v468 = vpop.f32.mrf.mxu0
      %v469 = vadd.f32 %v363, %v468
      %470 = vdwg.mxu0
      %v471 = vld [vmem:[%s224 + $0x2] sm:$0xff]
      %v472 = vld [vmem:[%s224 + $0xa] sm:$0xff]
      %v473 = vld [vmem:[%s224 + $0x1a] sm:$0xff]
      %v474 = vld [vmem:[%s224 + $0x22] sm:$0xff]
      %v475 = vld [vmem:[%s224 + $0x32] sm:$0xff]
      %v476 = vld [vmem:[%s224 + $0x3a] sm:$0xff]
      %v477 = vld [vmem:[%s224 + $0x4a] sm:$0xff]
      %v478 = vld [vmem:[%s224 + $0x52] sm:$0xff]
      %s479 = scalar_lea.vmem %s1, 64
      %v480 = vld [vmem:[%s479] sm:$0xff]
      %v481 = vld [vmem:[%s479 + $0x8] sm:$0xff]
      %v482 = vld [vmem:[%s479 + $0x10] sm:$0xff]
      %v483 = vld [vmem:[%s479 + $0x18] sm:$0xff]
      %v485 = vsel %vm258, %v471, 0
      %v488 = vsel %vm258, %v472, 0
      %v491 = vsel %vm258, %v473, 0
      %v494 = vsel %vm258, %v474, 0
      %v497 = vsel %vm258, %v475, 0
      %v500 = vsel %vm258, %v476, 0
      %v503 = vsel %vm258, %v477, 0
      %v506 = vsel %vm258, %v478, 0
      %508 = vmatpush.msra.mxu0 0.0
      %509 = vmatpush.msra.mxu0 0.0
      %510 = vmatpush.msra.mxu0 0.0
      %511 = vmatpush.msra.mxu0 0.0
      %512 = vmatpush.msra.mxu0 0.0
      %513 = vmatpush.msra.mxu0 0.0
      %514 = vmatpush.msra.mxu0 0.0
      %515 = vmatpush.msra.mxu0 0.0
      %516 = vmatpush.msra.mxu0 0.0
      %517 = vmatpush.msra.mxu0 0.0
      %518 = vmatpush.msra.mxu0 0.0
      %519 = vmatpush.msra.mxu0 0.0
      %520 = vmatpush.msra.mxu0 0.0
      %521 = vmatpush.msra.mxu0 0.0
      %522 = vmatpush.msra.mxu0 %v482
      %523 = vmatpush.msra.mxu0 %v480
      %524 = vmatmul.f32.gmra.mxu0 %v485
      %v525 = vpop.f32.mrf.mxu0
      %v526 = vadd.f32 0.0, %v525
      %527 = vmatmul.f32.gmra.mxu0 %v488
      %v528 = vpop.f32.mrf.mxu0
      %v529 = vadd.f32 0.0, %v528
      %530 = vmatmul.f32.gmra.mxu0 %v491
      %v531 = vpop.f32.mrf.mxu0
      %v532 = vadd.f32 0.0, %v531
      %533 = vmatmul.f32.gmra.mxu0 %v494
      %v534 = vpop.f32.mrf.mxu0
      %v535 = vadd.f32 0.0, %v534
      %536 = vmatmul.f32.gmra.mxu0 %v497
      %v537 = vpop.f32.mrf.mxu0
      %v538 = vadd.f32 0.0, %v537
      %539 = vmatmul.f32.gmra.mxu0 %v500
      %v540 = vpop.f32.mrf.mxu0
      %v541 = vadd.f32 0.0, %v540
      %542 = vmatmul.f32.gmra.mxu0 %v503
      %v543 = vpop.f32.mrf.mxu0
      %v544 = vadd.f32 0.0, %v543
      %545 = vmatmul.f32.gmra.mxu0 %v506
      %v546 = vpop.f32.mrf.mxu0
      %v547 = vadd.f32 0.0, %v546
      %548 = vdwg.mxu0
      %549 = vmatpush.msra.mxu0 0.0
      %550 = vmatpush.msra.mxu0 0.0
      %551 = vmatpush.msra.mxu0 0.0
      %552 = vmatpush.msra.mxu0 0.0
      %553 = vmatpush.msra.mxu0 0.0
      %554 = vmatpush.msra.mxu0 0.0
      %555 = vmatpush.msra.mxu0 0.0
      %556 = vmatpush.msra.mxu0 0.0
      %557 = vmatpush.msra.mxu0 0.0
      %558 = vmatpush.msra.mxu0 0.0
      %559 = vmatpush.msra.mxu0 0.0
      %560 = vmatpush.msra.mxu0 0.0
      %561 = vmatpush.msra.mxu0 0.0
      %562 = vmatpush.msra.mxu0 0.0
      %563 = vmatpush.msra.mxu0 %v483
      %564 = vmatpush.msra.mxu0 %v481
      %565 = vmatmul.f32.gmra.mxu0 %v485
      %v566 = vpop.f32.mrf.mxu0
      %v567 = vadd.f32 0.0, %v566
      %568 = vmatmul.f32.gmra.mxu0 %v488
      %v569 = vpop.f32.mrf.mxu0
      %v570 = vadd.f32 0.0, %v569
      %571 = vmatmul.f32.gmra.mxu0 %v491
      %v572 = vpop.f32.mrf.mxu0
      %v573 = vadd.f32 0.0, %v572
      %574 = vmatmul.f32.gmra.mxu0 %v494
      %v575 = vpop.f32.mrf.mxu0
      %v576 = vadd.f32 0.0, %v575
      %577 = vmatmul.f32.gmra.mxu0 %v497
      %v578 = vpop.f32.mrf.mxu0
      %v579 = vadd.f32 0.0, %v578
      %580 = vmatmul.f32.gmra.mxu0 %v500
      %v581 = vpop.f32.mrf.mxu0
      %v582 = vadd.f32 0.0, %v581
      %583 = vmatmul.f32.gmra.mxu0 %v503
      %v584 = vpop.f32.mrf.mxu0
      %v585 = vadd.f32 0.0, %v584
      %586 = vmatmul.f32.gmra.mxu0 %v506
      %v587 = vpop.f32.mrf.mxu0
      %v588 = vadd.f32 0.0, %v587
      %589 = vdwg.mxu0
      %v590 = vadd.f32 %v407, %v526
      %v591 = vadd.f32 %v448, %v567
      %v592 = vadd.f32 %v410, %v529
      %v593 = vadd.f32 %v451, %v570
      %v594 = vadd.f32 %v413, %v532
      %v595 = vadd.f32 %v454, %v573
      %v596 = vadd.f32 %v416, %v535
      %v597 = vadd.f32 %v457, %v576
      %v598 = vadd.f32 %v419, %v538
      %v599 = vadd.f32 %v460, %v579
      %v600 = vadd.f32 %v422, %v541
      %v601 = vadd.f32 %v463, %v582
      %v602 = vadd.f32 %v425, %v544
      %v603 = vadd.f32 %v466, %v585
      %v604 = vadd.f32 %v428, %v547
      %v605 = vadd.f32 %v469, %v588
      %v606 = vld [vmem:[%s224 + $0x3] sm:$0xff]
      %v607 = vld [vmem:[%s224 + $0xb] sm:$0xff]
      %v608 = vld [vmem:[%s224 + $0x1b] sm:$0xff]
      %v609 = vld [vmem:[%s224 + $0x23] sm:$0xff]
      %v610 = vld [vmem:[%s224 + $0x33] sm:$0xff]
      %v611 = vld [vmem:[%s224 + $0x3b] sm:$0xff]
      %v612 = vld [vmem:[%s224 + $0x4b] sm:$0xff]
      %v613 = vld [vmem:[%s224 + $0x53] sm:$0xff]
      %s614 = scalar_lea.vmem %s1, 96
      %v615 = vld [vmem:[%s614] sm:$0xff]
      %v616 = vld [vmem:[%s614 + $0x8] sm:$0xff]
      %v617 = vld [vmem:[%s614 + $0x10] sm:$0xff]
      %v618 = vld [vmem:[%s614 + $0x18] sm:$0xff]
      %v620 = vsel %vm258, %v606, 0
      %v623 = vsel %vm258, %v607, 0
      %v626 = vsel %vm258, %v608, 0
      %v629 = vsel %vm258, %v609, 0
      %v632 = vsel %vm258, %v610, 0
      %v635 = vsel %vm258, %v611, 0
      %v638 = vsel %vm258, %v612, 0
      %v641 = vsel %vm258, %v613, 0
      %643 = vmatpush.msra.mxu0 0.0
      %644 = vmatpush.msra.mxu0 0.0
      %645 = vmatpush.msra.mxu0 0.0
      %646 = vmatpush.msra.mxu0 0.0
      %647 = vmatpush.msra.mxu0 0.0
      %648 = vmatpush.msra.mxu0 0.0
      %649 = vmatpush.msra.mxu0 0.0
      %650 = vmatpush.msra.mxu0 0.0
      %651 = vmatpush.msra.mxu0 0.0
      %652 = vmatpush.msra.mxu0 0.0
      %653 = vmatpush.msra.mxu0 0.0
      %654 = vmatpush.msra.mxu0 0.0
      %655 = vmatpush.msra.mxu0 0.0
      %656 = vmatpush.msra.mxu0 0.0
      %657 = vmatpush.msra.mxu0 %v617
      %658 = vmatpush.msra.mxu0 %v615
      %659 = vmatmul.f32.gmra.mxu0 %v620
      %v660 = vpop.f32.mrf.mxu0
      %v661 = vadd.f32 0.0, %v660
      %662 = vmatmul.f32.gmra.mxu0 %v623
      %v663 = vpop.f32.mrf.mxu0
      %v664 = vadd.f32 0.0, %v663
      %665 = vmatmul.f32.gmra.mxu0 %v626
      %v666 = vpop.f32.mrf.mxu0
      %v667 = vadd.f32 0.0, %v666
      %668 = vmatmul.f32.gmra.mxu0 %v629
      %v669 = vpop.f32.mrf.mxu0
      %v670 = vadd.f32 0.0, %v669
      %671 = vmatmul.f32.gmra.mxu0 %v632
      %v672 = vpop.f32.mrf.mxu0
      %v673 = vadd.f32 0.0, %v672
      %674 = vmatmul.f32.gmra.mxu0 %v635
      %v675 = vpop.f32.mrf.mxu0
      %v676 = vadd.f32 0.0, %v675
      %677 = vmatmul.f32.gmra.mxu0 %v638
      %v678 = vpop.f32.mrf.mxu0
      %v679 = vadd.f32 0.0, %v678
      %680 = vmatmul.f32.gmra.mxu0 %v641
      %v681 = vpop.f32.mrf.mxu0
      %v682 = vadd.f32 0.0, %v681
      %683 = vdwg.mxu0
      %684 = vmatpush.msra.mxu0 0.0
      %685 = vmatpush.msra.mxu0 0.0
      %686 = vmatpush.msra.mxu0 0.0
      %687 = vmatpush.msra.mxu0 0.0
      %688 = vmatpush.msra.mxu0 0.0
      %689 = vmatpush.msra.mxu0 0.0
      %690 = vmatpush.msra.mxu0 0.0
      %691 = vmatpush.msra.mxu0 0.0
      %692 = vmatpush.msra.mxu0 0.0
      %693 = vmatpush.msra.mxu0 0.0
      %694 = vmatpush.msra.mxu0 0.0
      %695 = vmatpush.msra.mxu0 0.0
      %696 = vmatpush.msra.mxu0 0.0
      %697 = vmatpush.msra.mxu0 0.0
      %698 = vmatpush.msra.mxu0 %v618
      %699 = vmatpush.msra.mxu0 %v616
      %700 = vmatmul.f32.gmra.mxu0 %v620
      %v701 = vpop.f32.mrf.mxu0
      %v702 = vadd.f32 0.0, %v701
      %703 = vmatmul.f32.gmra.mxu0 %v623
      %v704 = vpop.f32.mrf.mxu0
      %v705 = vadd.f32 0.0, %v704
      %706 = vmatmul.f32.gmra.mxu0 %v626
      %v707 = vpop.f32.mrf.mxu0
      %v708 = vadd.f32 0.0, %v707
      %709 = vmatmul.f32.gmra.mxu0 %v629
      %v710 = vpop.f32.mrf.mxu0
      %v711 = vadd.f32 0.0, %v710
      %712 = vmatmul.f32.gmra.mxu0 %v632
      %v713 = vpop.f32.mrf.mxu0
      %v714 = vadd.f32 0.0, %v713
      %715 = vmatmul.f32.gmra.mxu0 %v635
      %v716 = vpop.f32.mrf.mxu0
      %v717 = vadd.f32 0.0, %v716
      %718 = vmatmul.f32.gmra.mxu0 %v638
      %v719 = vpop.f32.mrf.mxu0
      %v720 = vadd.f32 0.0, %v719
      %721 = vmatmul.f32.gmra.mxu0 %v641
      %v722 = vpop.f32.mrf.mxu0
      %v723 = vadd.f32 0.0, %v722
      %724 = vdwg.mxu0
      %v725 = vadd.f32 %v590, %v661
      %v726 = vadd.f32 %v591, %v702
      %v727 = vadd.f32 %v592, %v664
      %v728 = vadd.f32 %v593, %v705
      %v729 = vadd.f32 %v594, %v667
      %v730 = vadd.f32 %v595, %v708
      %v731 = vadd.f32 %v596, %v670
      %v732 = vadd.f32 %v597, %v711
      %v733 = vadd.f32 %v598, %v673
      %v734 = vadd.f32 %v599, %v714
      %v735 = vadd.f32 %v600, %v676
      %v736 = vadd.f32 %v601, %v717
      %v737 = vadd.f32 %v602, %v679
      %v738 = vadd.f32 %v603, %v720
      %v739 = vadd.f32 %v604, %v682
      %v740 = vadd.f32 %v605, %v723
      %v741 = vld [vmem:[%s224 + $0x4] sm:$0xff]
      %v742 = vld [vmem:[%s224 + $0xc] sm:$0xff]
      %v743 = vld [vmem:[%s224 + $0x1c] sm:$0xff]
      %v744 = vld [vmem:[%s224 + $0x24] sm:$0xff]
      %v745 = vld [vmem:[%s224 + $0x34] sm:$0xff]
      %v746 = vld [vmem:[%s224 + $0x3c] sm:$0xff]
      %v747 = vld [vmem:[%s224 + $0x4c] sm:$0xff]
      %v748 = vld [vmem:[%s224 + $0x54] sm:$0xff]
      %s749 = scalar_lea.vmem %s1, 128
      %v750 = vld [vmem:[%s749] sm:$0xff]
      %v751 = vld [vmem:[%s749 + $0x8] sm:$0xff]
      %v752 = vld [vmem:[%s749 + $0x10] sm:$0xff]
      %v753 = vld [vmem:[%s749 + $0x18] sm:$0xff]
      %v755 = vsel %vm258, %v741, 0
      %v758 = vsel %vm258, %v742, 0
      %v761 = vsel %vm258, %v743, 0
      %v764 = vsel %vm258, %v744, 0
      %v767 = vsel %vm258, %v745, 0
      %v770 = vsel %vm258, %v746, 0
      %v773 = vsel %vm258, %v747, 0
      %v776 = vsel %vm258, %v748, 0
      %778 = vmatpush.msra.mxu0 0.0
      %779 = vmatpush.msra.mxu0 0.0
      %780 = vmatpush.msra.mxu0 0.0
      %781 = vmatpush.msra.mxu0 0.0
      %782 = vmatpush.msra.mxu0 0.0
      %783 = vmatpush.msra.mxu0 0.0
      %784 = vmatpush.msra.mxu0 0.0
      %785 = vmatpush.msra.mxu0 0.0
      %786 = vmatpush.msra.mxu0 0.0
      %787 = vmatpush.msra.mxu0 0.0
      %788 = vmatpush.msra.mxu0 0.0
      %789 = vmatpush.msra.mxu0 0.0
      %790 = vmatpush.msra.mxu0 0.0
      %791 = vmatpush.msra.mxu0 0.0
      %792 = vmatpush.msra.mxu0 %v752
      %793 = vmatpush.msra.mxu0 %v750
      %794 = vmatmul.f32.gmra.mxu0 %v755
      %v795 = vpop.f32.mrf.mxu0
      %v796 = vadd.f32 0.0, %v795
      %797 = vmatmul.f32.gmra.mxu0 %v758
      %v798 = vpop.f32.mrf.mxu0
      %v799 = vadd.f32 0.0, %v798
      %800 = vmatmul.f32.gmra.mxu0 %v761
      %v801 = vpop.f32.mrf.mxu0
      %v802 = vadd.f32 0.0, %v801
      %803 = vmatmul.f32.gmra.mxu0 %v764
      %v804 = vpop.f32.mrf.mxu0
      %v805 = vadd.f32 0.0, %v804
      %806 = vmatmul.f32.gmra.mxu0 %v767
      %v807 = vpop.f32.mrf.mxu0
      %v808 = vadd.f32 0.0, %v807
      %809 = vmatmul.f32.gmra.mxu0 %v770
      %v810 = vpop.f32.mrf.mxu0
      %v811 = vadd.f32 0.0, %v810
      %812 = vmatmul.f32.gmra.mxu0 %v773
      %v813 = vpop.f32.mrf.mxu0
      %v814 = vadd.f32 0.0, %v813
      %815 = vmatmul.f32.gmra.mxu0 %v776
      %v816 = vpop.f32.mrf.mxu0
      %v817 = vadd.f32 0.0, %v816
      %818 = vdwg.mxu0
      %819 = vmatpush.msra.mxu0 0.0
      %820 = vmatpush.msra.mxu0 0.0
      %821 = vmatpush.msra.mxu0 0.0
      %822 = vmatpush.msra.mxu0 0.0
      %823 = vmatpush.msra.mxu0 0.0
      %824 = vmatpush.msra.mxu0 0.0
      %825 = vmatpush.msra.mxu0 0.0
      %826 = vmatpush.msra.mxu0 0.0
      %827 = vmatpush.msra.mxu0 0.0
      %828 = vmatpush.msra.mxu0 0.0
      %829 = vmatpush.msra.mxu0 0.0
      %830 = vmatpush.msra.mxu0 0.0
      %831 = vmatpush.msra.mxu0 0.0
      %832 = vmatpush.msra.mxu0 0.0
      %833 = vmatpush.msra.mxu0 %v753
      %834 = vmatpush.msra.mxu0 %v751
      %835 = vmatmul.f32.gmra.mxu0 %v755
      %v836 = vpop.f32.mrf.mxu0
      %v837 = vadd.f32 0.0, %v836
      %838 = vmatmul.f32.gmra.mxu0 %v758
      %v839 = vpop.f32.mrf.mxu0
      %v840 = vadd.f32 0.0, %v839
      %841 = vmatmul.f32.gmra.mxu0 %v761
      %v842 = vpop.f32.mrf.mxu0
      %v843 = vadd.f32 0.0, %v842
      %844 = vmatmul.f32.gmra.mxu0 %v764
      %v845 = vpop.f32.mrf.mxu0
      %v846 = vadd.f32 0.0, %v845
      %847 = vmatmul.f32.gmra.mxu0 %v767
      %v848 = vpop.f32.mrf.mxu0
      %v849 = vadd.f32 0.0, %v848
      %850 = vmatmul.f32.gmra.mxu0 %v770
      %v851 = vpop.f32.mrf.mxu0
      %v852 = vadd.f32 0.0, %v851
      %853 = vmatmul.f32.gmra.mxu0 %v773
      %v854 = vpop.f32.mrf.mxu0
      %v855 = vadd.f32 0.0, %v854
      %856 = vmatmul.f32.gmra.mxu0 %v776
      %v857 = vpop.f32.mrf.mxu0
      %v858 = vadd.f32 0.0, %v857
      %859 = vdwg.mxu0
      %v860 = vadd.f32 %v725, %v796
      %v861 = vadd.f32 %v726, %v837
      %v862 = vadd.f32 %v727, %v799
      %v863 = vadd.f32 %v728, %v840
      %v864 = vadd.f32 %v729, %v802
      %v865 = vadd.f32 %v730, %v843
      %v866 = vadd.f32 %v731, %v805
      %v867 = vadd.f32 %v732, %v846
      %v868 = vadd.f32 %v733, %v808
      %v869 = vadd.f32 %v734, %v849
      %v870 = vadd.f32 %v735, %v811
      %v871 = vadd.f32 %v736, %v852
      %v872 = vadd.f32 %v737, %v814
      %v873 = vadd.f32 %v738, %v855
      %v874 = vadd.f32 %v739, %v817
      %v875 = vadd.f32 %v740, %v858
      %v876 = vld [vmem:[%s2] sm:$0x3]
      %v878 = vperm.slane %v876, 0
      %v879 = vperm.slane %v876, 1
      %v882 = vadd.f32 %v860, %v878
      %v883 = vadd.f32 %v861, %v879
      %v884 = vadd.f32 %v862, %v878
      %v885 = vadd.f32 %v863, %v879
      %v886 = vadd.f32 %v864, %v878
      %v887 = vadd.f32 %v865, %v879
      %v888 = vadd.f32 %v866, %v878
      %v889 = vadd.f32 %v867, %v879
      %v890 = vadd.f32 %v868, %v878
      %v891 = vadd.f32 %v869, %v879
      %v892 = vadd.f32 %v870, %v878
      %v893 = vadd.f32 %v871, %v879
      %v894 = vadd.f32 %v872, %v878
      %v895 = vadd.f32 %v873, %v879
      %v896 = vadd.f32 %v874, %v878
      %v897 = vadd.f32 %v875, %v879
      %v898 = vmax.f32 %v882, 0.0
      %v899 = vmax.f32 %v883, 0.0
      %v900 = vmax.f32 %v884, 0.0
      %v901 = vmax.f32 %v885, 0.0
      %v902 = vmax.f32 %v886, 0.0
      %v903 = vmax.f32 %v887, 0.0
      %v904 = vmax.f32 %v888, 0.0
      %v905 = vmax.f32 %v889, 0.0
      %v906 = vmax.f32 %v890, 0.0
      %v907 = vmax.f32 %v891, 0.0
      %v908 = vmax.f32 %v892, 0.0
      %v909 = vmax.f32 %v893, 0.0
      %v910 = vmax.f32 %v894, 0.0
      %v911 = vmax.f32 %v895, 0.0
      %v912 = vmax.f32 %v896, 0.0
      %v913 = vmax.f32 %v897, 0.0
      %914 = vst [vmem:[#allocation2] sm:$0xff] %v898
      %vm915 = vcmask 523264
      %916 = vst.msk [vmem:[#allocation2 + $0x8] sm:$0xff] %vm915, %v899
      %917 = vst [vmem:[#allocation2 + $0x10] sm:$0xff] %v900
      %918 = vst.msk [vmem:[#allocation2 + $0x18] sm:$0xff] %vm915, %v901
      %919 = vst [vmem:[#allocation2 + $0x20] sm:$0xff] %v902
      %920 = vst.msk [vmem:[#allocation2 + $0x28] sm:$0xff] %vm915, %v903
      %921 = vst [vmem:[#allocation2 + $0x30] sm:$0xff] %v904
      %922 = vst.msk [vmem:[#allocation2 + $0x38] sm:$0xff] %vm915, %v905
      %923 = vst [vmem:[#allocation2 + $0x40] sm:$0xff] %v906
      %924 = vst.msk [vmem:[#allocation2 + $0x48] sm:$0xff] %vm915, %v907
      %925 = vst [vmem:[#allocation2 + $0x50] sm:$0xff] %v908
      %926 = vst.msk [vmem:[#allocation2 + $0x58] sm:$0xff] %vm915, %v909
      %927 = vst [vmem:[#allocation2 + $0x60] sm:$0xff] %v910
      %928 = vst.msk [vmem:[#allocation2 + $0x68] sm:$0xff] %vm915, %v911
      %929 = vst [vmem:[#allocation2 + $0x70] sm:$0xff] %v912
      %930 = vst.msk [vmem:[#allocation2 + $0x78] sm:$0xff] %vm915, %v913
      %v931 = vld [vmem:[#allocation2] sm:$0xff]
      %v932 = vld [vmem:[#allocation2 + $0x8] sm:$0xff]
      %v933 = vld [vmem:[#allocation2 + $0x20] sm:$0xff]
      %v934 = vld [vmem:[#allocation2 + $0x28] sm:$0xff]
      %v935 = vld [vmem:[#allocation2 + $0x40] sm:$0xff]
      %v936 = vld [vmem:[#allocation2 + $0x48] sm:$0xff]
      %v937 = vld [vmem:[#allocation2 + $0x60] sm:$0xff]
      %v938 = vld [vmem:[#allocation2 + $0x68] sm:$0xff]
      %v939 = vld [vmem:[%s3] sm:$0xff]
      %v940 = vld [vmem:[%s3 + $0x8] sm:$0xff]
      %v941 = vld [vmem:[%s3 + $0x10] sm:$0xff]
      %v942 = vld [vmem:[%s3 + $0x18] sm:$0xff]
      %v943 = vld [vmem:[%s3 + $0x20] sm:$0xff]
      %v944 = vld [vmem:[%s3 + $0x28] sm:$0xff]
      %v945 = vld [vmem:[%s3 + $0x30] sm:$0xff]
      %v946 = vld [vmem:[%s3 + $0x38] sm:$0xff]
      %v947 = vld [vmem:[%s3 + $0x40] sm:$0xff]
      %v948 = vld [vmem:[%s3 + $0x48] sm:$0xff]
      %v949 = vld [vmem:[%s3 + $0x50] sm:$0xff]
      %v950 = vld [vmem:[%s3 + $0x58] sm:$0xff]
      %v951 = vld [vmem:[%s3 + $0x60] sm:$0xff]
      %v952 = vld [vmem:[%s3 + $0x68] sm:$0xff]
      %v953 = vld [vmem:[%s3 + $0x70] sm:$0xff]
      %v954 = vld [vmem:[%s3 + $0x78] sm:$0xff]
      %v955 = vld [vmem:[%s3 + $0x80] sm:$0xff]
      %v956 = vld [vmem:[%s3 + $0x88] sm:$0xff]
      %v957 = vld [vmem:[%s3 + $0x90] sm:$0xff]
      %v958 = vld [vmem:[%s3 + $0x98] sm:$0xff]
      %v959 = vld [vmem:[%s3 + $0xa0] sm:$0xff]
      %v960 = vld [vmem:[%s3 + $0xa8] sm:$0xff]
      %v961 = vld [vmem:[%s3 + $0xb0] sm:$0xff]
      %v962 = vld [vmem:[%s3 + $0xb8] sm:$0xff]
      %v963 = vld [vmem:[%s3 + $0xc0] sm:$0xff]
      %v964 = vld [vmem:[%s3 + $0xc8] sm:$0xff]
      %v965 = vld [vmem:[%s3 + $0xd0] sm:$0xff]
      %v966 = vld [vmem:[%s3 + $0xd8] sm:$0xff]
      %v967 = vld [vmem:[%s3 + $0xe0] sm:$0xff]
      %v968 = vld [vmem:[%s3 + $0xe8] sm:$0xff]
      %v969 = vld [vmem:[%s3 + $0xf0] sm:$0xff]
      %v970 = vld [vmem:[%s3 + $0xf8] sm:$0xff]
      %v971 = vld [vmem:[%s3 + $0x100] sm:$0xff]
      %v972 = vld [vmem:[%s3 + $0x108] sm:$0xff]
      %v973 = vld [vmem:[%s3 + $0x110] sm:$0xff]
      %v974 = vld [vmem:[%s3 + $0x118] sm:$0xff]
      %v975 = vld [vmem:[%s3 + $0x120] sm:$0xff]
      %v976 = vld [vmem:[%s3 + $0x128] sm:$0xff]
      %v977 = vld [vmem:[%s3 + $0x130] sm:$0xff]
      %v978 = vld [vmem:[%s3 + $0x138] sm:$0xff]
      %v979 = vld [vmem:[%s3 + $0x140] sm:$0xff]
      %v980 = vld [vmem:[%s3 + $0x148] sm:$0xff]
      %v981 = vld [vmem:[%s3 + $0x150] sm:$0xff]
      %v982 = vld [vmem:[%s3 + $0x158] sm:$0xff]
      %v983 = vld [vmem:[%s3 + $0x160] sm:$0xff]
      %v984 = vld [vmem:[%s3 + $0x168] sm:$0xff]
      %v985 = vld [vmem:[%s3 + $0x170] sm:$0xff]
      %v986 = vld [vmem:[%s3 + $0x178] sm:$0xff]
      %v987 = vld [vmem:[#allocation2] sm:$0xfe]
      %v988 = vld [vmem:[#allocation2 + $0x8] sm:$0xfe]
      %v989 = vld [vmem:[#allocation2 + $0x10] sm:$0x1]
      %v990 = vld [vmem:[#allocation2 + $0x18] sm:$0x1]
      %v991 = vld [vmem:[#allocation2 + $0x20] sm:$0xfe]
      %v992 = vld [vmem:[#allocation2 + $0x28] sm:$0xfe]
      %v993 = vld [vmem:[#allocation2 + $0x30] sm:$0x1]
      %v994 = vld [vmem:[#allocation2 + $0x38] sm:$0x1]
      %v995 = vld [vmem:[#allocation2 + $0x40] sm:$0xfe]
      %v996 = vld [vmem:[#allocation2 + $0x48] sm:$0xfe]
      %v997 = vld [vmem:[#allocation2 + $0x50] sm:$0x1]
      %v998 = vld [vmem:[#allocation2 + $0x58] sm:$0x1]
      %v999 = vld [vmem:[#allocation2 + $0x60] sm:$0xfe]
      %v1000 = vld [vmem:[#allocation2 + $0x68] sm:$0xfe]
      %v1001 = vld [vmem:[#allocation2 + $0x70] sm:$0x1]
      %v1002 = vld [vmem:[#allocation2 + $0x78] sm:$0x1]
      %vm1019 = vcmask 1046528
      %v1020 = vrot.slane %v987, 1
      %v1021 = vrot.slane %v989, 1
      %v1022 = vsel %vm1019, %v1020, %v1021
      %v1023 = vrot.slane %v988, 1
      %v1024 = vrot.slane %v990, 1
      %v1025 = vsel %vm1019, %v1023, %v1024
      %v1026 = vrot.slane %v991, 1
      %v1027 = vrot.slane %v993, 1
      %v1028 = vsel %vm1019, %v1026, %v1027
      %v1029 = vrot.slane %v992, 1
      %v1030 = vrot.slane %v994, 1
      %v1031 = vsel %vm1019, %v1029, %v1030
      %v1032 = vrot.slane %v995, 1
      %v1033 = vrot.slane %v997, 1
      %v1034 = vsel %vm1019, %v1032, %v1033
      %v1035 = vrot.slane %v996, 1
      %v1036 = vrot.slane %v998, 1
      %v1037 = vsel %vm1019, %v1035, %v1036
      %v1038 = vrot.slane %v999, 1
      %v1039 = vrot.slane %v1001, 1
      %v1040 = vsel %vm1019, %v1038, %v1039
      %v1041 = vrot.slane %v1000, 1
      %v1042 = vrot.slane %v1002, 1
      %v1043 = vsel %vm1019, %v1041, %v1042
      %s1048 = scalar_lea.vmem %s3, 384
      %v1049 = vld [vmem:[%s1048] sm:$0xff]
      %v1050 = vld [vmem:[%s1048 + $0x8] sm:$0xff]
      %v1051 = vld [vmem:[%s1048 + $0x10] sm:$0xff]
      %v1052 = vld [vmem:[%s1048 + $0x18] sm:$0xff]
      %v1053 = vld [vmem:[%s1048 + $0x20] sm:$0xff]
      %v1054 = vld [vmem:[%s1048 + $0x28] sm:$0xff]
      %v1055 = vld [vmem:[%s1048 + $0x30] sm:$0xff]
      %v1056 = vld [vmem:[%s1048 + $0x38] sm:$0xff]
      %v1057 = vld [vmem:[%s1048 + $0x40] sm:$0xff]
      %v1058 = vld [vmem:[%s1048 + $0x48] sm:$0xff]
      %v1059 = vld [vmem:[%s1048 + $0x50] sm:$0xff]
      %v1060 = vld [vmem:[%s1048 + $0x58] sm:$0xff]
      %v1061 = vld [vmem:[%s1048 + $0x60] sm:$0xff]
      %v1062 = vld [vmem:[%s1048 + $0x68] sm:$0xff]
      %v1063 = vld [vmem:[%s1048 + $0x70] sm:$0xff]
      %v1064 = vld [vmem:[%s1048 + $0x78] sm:$0xff]
      %v1065 = vld [vmem:[%s1048 + $0x80] sm:$0xff]
      %v1066 = vld [vmem:[%s1048 + $0x88] sm:$0xff]
      %v1067 = vld [vmem:[%s1048 + $0x90] sm:$0xff]
      %v1068 = vld [vmem:[%s1048 + $0x98] sm:$0xff]
      %v1069 = vld [vmem:[%s1048 + $0xa0] sm:$0xff]
      %v1070 = vld [vmem:[%s1048 + $0xa8] sm:$0xff]
      %v1071 = vld [vmem:[%s1048 + $0xb0] sm:$0xff]
      %v1072 = vld [vmem:[%s1048 + $0xb8] sm:$0xff]
      %v1073 = vld [vmem:[%s1048 + $0xc0] sm:$0xff]
      %v1074 = vld [vmem:[%s1048 + $0xc8] sm:$0xff]
      %v1075 = vld [vmem:[%s1048 + $0xd0] sm:$0xff]
      %v1076 = vld [vmem:[%s1048 + $0xd8] sm:$0xff]
      %v1077 = vld [vmem:[%s1048 + $0xe0] sm:$0xff]
      %v1078 = vld [vmem:[%s1048 + $0xe8] sm:$0xff]
      %v1079 = vld [vmem:[%s1048 + $0xf0] sm:$0xff]
      %v1080 = vld [vmem:[%s1048 + $0xf8] sm:$0xff]
      %v1081 = vld [vmem:[%s1048 + $0x100] sm:$0xff]
      %v1082 = vld [vmem:[%s1048 + $0x108] sm:$0xff]
      %v1083 = vld [vmem:[%s1048 + $0x110] sm:$0xff]
      %v1084 = vld [vmem:[%s1048 + $0x118] sm:$0xff]
      %v1085 = vld [vmem:[%s1048 + $0x120] sm:$0xff]
      %v1086 = vld [vmem:[%s1048 + $0x128] sm:$0xff]
      %v1087 = vld [vmem:[%s1048 + $0x130] sm:$0xff]
      %v1088 = vld [vmem:[%s1048 + $0x138] sm:$0xff]
      %v1089 = vld [vmem:[%s1048 + $0x140] sm:$0xff]
      %v1090 = vld [vmem:[%s1048 + $0x148] sm:$0xff]
      %v1091 = vld [vmem:[%s1048 + $0x150] sm:$0xff]
      %v1092 = vld [vmem:[%s1048 + $0x158] sm:$0xff]
      %v1093 = vld [vmem:[%s1048 + $0x160] sm:$0xff]
      %v1094 = vld [vmem:[%s1048 + $0x168] sm:$0xff]
      %v1095 = vld [vmem:[%s1048 + $0x170] sm:$0xff]
      %v1096 = vld [vmem:[%s1048 + $0x178] sm:$0xff]
      %v1097 = vsel %vm915, %v1025, 0
      %v1099 = vsel %vm915, %v1031, 0
      %v1101 = vsel %vm915, %v1037, 0
      %v1103 = vsel %vm915, %v1043, 0
      %1105 = vmatpush.msra.mxu0 %v1079
      %1106 = vmatpush.msra.mxu0 %v1077
      %1107 = vmatpush.msra.mxu0 %v1075
      %1108 = vmatpush.msra.mxu0 %v1073
      %1109 = vmatpush.msra.mxu0 %v1071
      %1110 = vmatpush.msra.mxu0 %v1069
      %1111 = vmatpush.msra.mxu0 %v1067
      %1112 = vmatpush.msra.mxu0 %v1065
      %1113 = vmatpush.msra.mxu0 %v1063
      %1114 = vmatpush.msra.mxu0 %v1061
      %1115 = vmatpush.msra.mxu0 %v1059
      %1116 = vmatpush.msra.mxu0 %v1057
      %1117 = vmatpush.msra.mxu0 %v1055
      %1118 = vmatpush.msra.mxu0 %v1053
      %1119 = vmatpush.msra.mxu0 %v1051
      %1120 = vmatpush.msra.mxu0 %v1049
      %1121 = vmatmul.f32.gmra.mxu0 %v1022
      %v1122 = vpop.f32.mrf.mxu0
      %v1123 = vadd.f32 0.0, %v1122
      %1124 = vmatmul.f32.gmra.mxu0 %v1028
      %v1125 = vpop.f32.mrf.mxu0
      %v1126 = vadd.f32 0.0, %v1125
      %1127 = vmatmul.f32.gmra.mxu0 %v1034
      %v1128 = vpop.f32.mrf.mxu0
      %v1129 = vadd.f32 0.0, %v1128
      %1130 = vmatmul.f32.gmra.mxu0 %v1040
      %v1131 = vpop.f32.mrf.mxu0
      %v1132 = vadd.f32 0.0, %v1131
      %1133 = vdwg.mxu0
      %1134 = vmatpush.msra.mxu0 0.0
      %1135 = vmatpush.msra.mxu0 0.0
      %1136 = vmatpush.msra.mxu0 0.0
      %1137 = vmatpush.msra.mxu0 0.0
      %1138 = vmatpush.msra.mxu0 0.0
      %1139 = vmatpush.msra.mxu0 0.0
      %1140 = vmatpush.msra.mxu0 0.0
      %1141 = vmatpush.msra.mxu0 0.0
      %1142 = vmatpush.msra.mxu0 %v1095
      %1143 = vmatpush.msra.mxu0 %v1093
      %1144 = vmatpush.msra.mxu0 %v1091
      %1145 = vmatpush.msra.mxu0 %v1089
      %1146 = vmatpush.msra.mxu0 %v1087
      %1147 = vmatpush.msra.mxu0 %v1085
      %1148 = vmatpush.msra.mxu0 %v1083
      %1149 = vmatpush.msra.mxu0 %v1081
      %1150 = vmatmul.f32.gmra.mxu0 %v1097
      %v1151 = vpop.f32.mrf.mxu0
      %v1152 = vadd.f32 %v1123, %v1151
      %1153 = vmatmul.f32.gmra.mxu0 %v1099
      %v1154 = vpop.f32.mrf.mxu0
      %v1155 = vadd.f32 %v1126, %v1154
      %1156 = vmatmul.f32.gmra.mxu0 %v1101
      %v1157 = vpop.f32.mrf.mxu0
      %v1158 = vadd.f32 %v1129, %v1157
      %1159 = vmatmul.f32.gmra.mxu0 %v1103
      %v1160 = vpop.f32.mrf.mxu0
      %v1161 = vadd.f32 %v1132, %v1160
      %1162 = vdwg.mxu0
      %1163 = vmatpush.msra.mxu0 %v1080
      %1164 = vmatpush.msra.mxu0 %v1078
      %1165 = vmatpush.msra.mxu0 %v1076
      %1166 = vmatpush.msra.mxu0 %v1074
      %1167 = vmatpush.msra.mxu0 %v1072
      %1168 = vmatpush.msra.mxu0 %v1070
      %1169 = vmatpush.msra.mxu0 %v1068
      %1170 = vmatpush.msra.mxu0 %v1066
      %1171 = vmatpush.msra.mxu0 %v1064
      %1172 = vmatpush.msra.mxu0 %v1062
      %1173 = vmatpush.msra.mxu0 %v1060
      %1174 = vmatpush.msra.mxu0 %v1058
      %1175 = vmatpush.msra.mxu0 %v1056
      %1176 = vmatpush.msra.mxu0 %v1054
      %1177 = vmatpush.msra.mxu0 %v1052
      %1178 = vmatpush.msra.mxu0 %v1050
      %1179 = vmatmul.f32.gmra.mxu0 %v1022
      %v1180 = vpop.f32.mrf.mxu0
      %v1181 = vadd.f32 0.0, %v1180
      %1182 = vmatmul.f32.gmra.mxu0 %v1028
      %v1183 = vpop.f32.mrf.mxu0
      %v1184 = vadd.f32 0.0, %v1183
      %1185 = vmatmul.f32.gmra.mxu0 %v1034
      %v1186 = vpop.f32.mrf.mxu0
      %v1187 = vadd.f32 0.0, %v1186
      %1188 = vmatmul.f32.gmra.mxu0 %v1040
      %v1189 = vpop.f32.mrf.mxu0
      %v1190 = vadd.f32 0.0, %v1189
      %1191 = vdwg.mxu0
      %1192 = vmatpush.msra.mxu0 0.0
      %1193 = vmatpush.msra.mxu0 0.0
      %1194 = vmatpush.msra.mxu0 0.0
      %1195 = vmatpush.msra.mxu0 0.0
      %1196 = vmatpush.msra.mxu0 0.0
      %1197 = vmatpush.msra.mxu0 0.0
      %1198 = vmatpush.msra.mxu0 0.0
      %1199 = vmatpush.msra.mxu0 0.0
      %1200 = vmatpush.msra.mxu0 %v1096
      %1201 = vmatpush.msra.mxu0 %v1094
      %1202 = vmatpush.msra.mxu0 %v1092
      %1203 = vmatpush.msra.mxu0 %v1090
      %1204 = vmatpush.msra.mxu0 %v1088
      %1205 = vmatpush.msra.mxu0 %v1086
      %1206 = vmatpush.msra.mxu0 %v1084
      %1207 = vmatpush.msra.mxu0 %v1082
      %1208 = vmatmul.f32.gmra.mxu0 %v1097
      %v1209 = vpop.f32.mrf.mxu0
      %v1210 = vadd.f32 %v1181, %v1209
      %1211 = vmatmul.f32.gmra.mxu0 %v1099
      %v1212 = vpop.f32.mrf.mxu0
      %v1213 = vadd.f32 %v1184, %v1212
      %1214 = vmatmul.f32.gmra.mxu0 %v1101
      %v1215 = vpop.f32.mrf.mxu0
      %v1216 = vadd.f32 %v1187, %v1215
      %1217 = vmatmul.f32.gmra.mxu0 %v1103
      %v1218 = vpop.f32.mrf.mxu0
      %v1219 = vadd.f32 %v1190, %v1218
      %1220 = vdwg.mxu0
      %v1222 = vsel %vm915, %v932, 0
      %v1225 = vsel %vm915, %v934, 0
      %v1228 = vsel %vm915, %v936, 0
      %v1231 = vsel %vm915, %v938, 0
      %1233 = vmatpush.msra.mxu0 %v969
      %1234 = vmatpush.msra.mxu0 %v967
      %1235 = vmatpush.msra.mxu0 %v965
      %1236 = vmatpush.msra.mxu0 %v963
      %1237 = vmatpush.msra.mxu0 %v961
      %1238 = vmatpush.msra.mxu0 %v959
      %1239 = vmatpush.msra.mxu0 %v957
      %1240 = vmatpush.msra.mxu0 %v955
      %1241 = vmatpush.msra.mxu0 %v953
      %1242 = vmatpush.msra.mxu0 %v951
      %1243 = vmatpush.msra.mxu0 %v949
      %1244 = vmatpush.msra.mxu0 %v947
      %1245 = vmatpush.msra.mxu0 %v945
      %1246 = vmatpush.msra.mxu0 %v943
      %1247 = vmatpush.msra.mxu0 %v941
      %1248 = vmatpush.msra.mxu0 %v939
      %1249 = vmatmul.f32.gmra.mxu0 %v931
      %v1250 = vpop.f32.mrf.mxu0
      %v1251 = vadd.f32 %v1152, %v1250
      %1252 = vmatmul.f32.gmra.mxu0 %v933
      %v1253 = vpop.f32.mrf.mxu0
      %v1254 = vadd.f32 %v1155, %v1253
      %1255 = vmatmul.f32.gmra.mxu0 %v935
      %v1256 = vpop.f32.mrf.mxu0
      %v1257 = vadd.f32 %v1158, %v1256
      %1258 = vmatmul.f32.gmra.mxu0 %v937
      %v1259 = vpop.f32.mrf.mxu0
      %v1260 = vadd.f32 %v1161, %v1259
      %1261 = vdwg.mxu0
      %1262 = vmatpush.msra.mxu0 0.0
      %1263 = vmatpush.msra.mxu0 0.0
      %1264 = vmatpush.msra.mxu0 0.0
      %1265 = vmatpush.msra.mxu0 0.0
      %1266 = vmatpush.msra.mxu0 0.0
      %1267 = vmatpush.msra.mxu0 0.0
      %1268 = vmatpush.msra.mxu0 0.0
      %1269 = vmatpush.msra.mxu0 0.0
      %1270 = vmatpush.msra.mxu0 %v985
      %1271 = vmatpush.msra.mxu0 %v983
      %1272 = vmatpush.msra.mxu0 %v981
      %1273 = vmatpush.msra.mxu0 %v979
      %1274 = vmatpush.msra.mxu0 %v977
      %1275 = vmatpush.msra.mxu0 %v975
      %1276 = vmatpush.msra.mxu0 %v973
      %1277 = vmatpush.msra.mxu0 %v971
      %1278 = vmatmul.f32.gmra.mxu0 %v1222
      %v1279 = vpop.f32.mrf.mxu0
      %v1280 = vadd.f32 %v1251, %v1279
      %1281 = vmatmul.f32.gmra.mxu0 %v1225
      %v1282 = vpop.f32.mrf.mxu0
      %v1283 = vadd.f32 %v1254, %v1282
      %1284 = vmatmul.f32.gmra.mxu0 %v1228
      %v1285 = vpop.f32.mrf.mxu0
      %v1286 = vadd.f32 %v1257, %v1285
      %1287 = vmatmul.f32.gmra.mxu0 %v1231
      %v1288 = vpop.f32.mrf.mxu0
      %v1289 = vadd.f32 %v1260, %v1288
      %1290 = vdwg.mxu0
      %1291 = vmatpush.msra.mxu0 %v970
      %1292 = vmatpush.msra.mxu0 %v968
      %1293 = vmatpush.msra.mxu0 %v966
      %1294 = vmatpush.msra.mxu0 %v964
      %1295 = vmatpush.msra.mxu0 %v962
      %1296 = vmatpush.msra.mxu0 %v960
      %1297 = vmatpush.msra.mxu0 %v958
      %1298 = vmatpush.msra.mxu0 %v956
      %1299 = vmatpush.msra.mxu0 %v954
      %1300 = vmatpush.msra.mxu0 %v952
      %1301 = vmatpush.msra.mxu0 %v950
      %1302 = vmatpush.msra.mxu0 %v948
      %1303 = vmatpush.msra.mxu0 %v946
      %1304 = vmatpush.msra.mxu0 %v944
      %1305 = vmatpush.msra.mxu0 %v942
      %1306 = vmatpush.msra.mxu0 %v940
      %1307 = vmatmul.f32.gmra.mxu0 %v931
      %v1308 = vpop.f32.mrf.mxu0
      %v1309 = vadd.f32 %v1210, %v1308
      %1310 = vmatmul.f32.gmra.mxu0 %v933
      %v1311 = vpop.f32.mrf.mxu0
      %v1312 = vadd.f32 %v1213, %v1311
      %1313 = vmatmul.f32.gmra.mxu0 %v935
      %v1314 = vpop.f32.mrf.mxu0
      %v1315 = vadd.f32 %v1216, %v1314
      %1316 = vmatmul.f32.gmra.mxu0 %v937
      %v1317 = vpop.f32.mrf.mxu0
      %v1318 = vadd.f32 %v1219, %v1317
      %1319 = vdwg.mxu0
      %1320 = vmatpush.msra.mxu0 0.0
      %1321 = vmatpush.msra.mxu0 0.0
      %1322 = vmatpush.msra.mxu0 0.0
      %1323 = vmatpush.msra.mxu0 0.0
      %1324 = vmatpush.msra.mxu0 0.0
      %1325 = vmatpush.msra.mxu0 0.0
      %1326 = vmatpush.msra.mxu0 0.0
      %1327 = vmatpush.msra.mxu0 0.0
      %1328 = vmatpush.msra.mxu0 %v986
      %1329 = vmatpush.msra.mxu0 %v984
      %1330 = vmatpush.msra.mxu0 %v982
      %1331 = vmatpush.msra.mxu0 %v980
      %1332 = vmatpush.msra.mxu0 %v978
      %1333 = vmatpush.msra.mxu0 %v976
      %1334 = vmatpush.msra.mxu0 %v974
      %1335 = vmatpush.msra.mxu0 %v972
      %1336 = vmatmul.f32.gmra.mxu0 %v1222
      %v1337 = vpop.f32.mrf.mxu0
      %v1338 = vadd.f32 %v1309, %v1337
      %1339 = vmatmul.f32.gmra.mxu0 %v1225
      %v1340 = vpop.f32.mrf.mxu0
      %v1341 = vadd.f32 %v1312, %v1340
      %1342 = vmatmul.f32.gmra.mxu0 %v1228
      %v1343 = vpop.f32.mrf.mxu0
      %v1344 = vadd.f32 %v1315, %v1343
      %1345 = vmatmul.f32.gmra.mxu0 %v1231
      %v1346 = vpop.f32.mrf.mxu0
      %v1347 = vadd.f32 %v1318, %v1346
      %1348 = vdwg.mxu0
      %v1349 = vld [vmem:[#allocation2] sm:$0xfc]
      %v1350 = vld [vmem:[#allocation2 + $0x8] sm:$0xfc]
      %v1351 = vld [vmem:[#allocation2 + $0x10] sm:$0x3]
      %v1352 = vld [vmem:[#allocation2 + $0x18] sm:$0x3]
      %v1353 = vld [vmem:[#allocation2 + $0x20] sm:$0xfc]
      %v1354 = vld [vmem:[#allocation2 + $0x28] sm:$0xfc]
      %v1355 = vld [vmem:[#allocation2 + $0x30] sm:$0x3]
      %v1356 = vld [vmem:[#allocation2 + $0x38] sm:$0x3]
      %v1357 = vld [vmem:[#allocation2 + $0x40] sm:$0xfc]
      %v1358 = vld [vmem:[#allocation2 + $0x48] sm:$0xfc]
      %v1359 = vld [vmem:[#allocation2 + $0x50] sm:$0x3]
      %v1360 = vld [vmem:[#allocation2 + $0x58] sm:$0x3]
      %v1361 = vld [vmem:[#allocation2 + $0x60] sm:$0xfc]
      %v1362 = vld [vmem:[#allocation2 + $0x68] sm:$0xfc]
      %v1363 = vld [vmem:[#allocation2 + $0x70] sm:$0x3]
      %v1364 = vld [vmem:[#allocation2 + $0x78] sm:$0x3]
      %vm1381 = vcmask 1045504
      %v1382 = vrot.slane %v1349, 2
      %v1383 = vrot.slane %v1351, 2
      %v1384 = vsel %vm1381, %v1382, %v1383
      %v1385 = vrot.slane %v1350, 2
      %v1386 = vrot.slane %v1352, 2
      %v1387 = vsel %vm1381, %v1385, %v1386
      %v1388 = vrot.slane %v1353, 2
      %v1389 = vrot.slane %v1355, 2
      %v1390 = vsel %vm1381, %v1388, %v1389
      %v1391 = vrot.slane %v1354, 2
      %v1392 = vrot.slane %v1356, 2
      %v1393 = vsel %vm1381, %v1391, %v1392
      %v1394 = vrot.slane %v1357, 2
      %v1395 = vrot.slane %v1359, 2
      %v1396 = vsel %vm1381, %v1394, %v1395
      %v1397 = vrot.slane %v1358, 2
      %v1398 = vrot.slane %v1360, 2
      %v1399 = vsel %vm1381, %v1397, %v1398
      %v1400 = vrot.slane %v1361, 2
      %v1401 = vrot.slane %v1363, 2
      %v1402 = vsel %vm1381, %v1400, %v1401
      %v1403 = vrot.slane %v1362, 2
      %v1404 = vrot.slane %v1364, 2
      %v1405 = vsel %vm1381, %v1403, %v1404
      %s1410 = scalar_lea.vmem %s3, 768
      %v1411 = vld [vmem:[%s1410] sm:$0xff]
      %v1412 = vld [vmem:[%s1410 + $0x8] sm:$0xff]
      %v1413 = vld [vmem:[%s1410 + $0x10] sm:$0xff]
      %v1414 = vld [vmem:[%s1410 + $0x18] sm:$0xff]
      %v1415 = vld [vmem:[%s1410 + $0x20] sm:$0xff]
      %v1416 = vld [vmem:[%s1410 + $0x28] sm:$0xff]
      %v1417 = vld [vmem:[%s1410 + $0x30] sm:$0xff]
      %v1418 = vld [vmem:[%s1410 + $0x38] sm:$0xff]
      %v1419 = vld [vmem:[%s1410 + $0x40] sm:$0xff]
      %v1420 = vld [vmem:[%s1410 + $0x48] sm:$0xff]
      %v1421 = vld [vmem:[%s1410 + $0x50] sm:$0xff]
      %v1422 = vld [vmem:[%s1410 + $0x58] sm:$0xff]
      %v1423 = vld [vmem:[%s1410 + $0x60] sm:$0xff]
      %v1424 = vld [vmem:[%s1410 + $0x68] sm:$0xff]
      %v1425 = vld [vmem:[%s1410 + $0x70] sm:$0xff]
      %v1426 = vld [vmem:[%s1410 + $0x78] sm:$0xff]
      %v1427 = vld [vmem:[%s1410 + $0x80] sm:$0xff]
      %v1428 = vld [vmem:[%s1410 + $0x88] sm:$0xff]
      %v1429 = vld [vmem:[%s1410 + $0x90] sm:$0xff]
      %v1430 = vld [vmem:[%s1410 + $0x98] sm:$0xff]
      %v1431 = vld [vmem:[%s1410 + $0xa0] sm:$0xff]
      %v1432 = vld [vmem:[%s1410 + $0xa8] sm:$0xff]
      %v1433 = vld [vmem:[%s1410 + $0xb0] sm:$0xff]
      %v1434 = vld [vmem:[%s1410 + $0xb8] sm:$0xff]
      %v1435 = vld [vmem:[%s1410 + $0xc0] sm:$0xff]
      %v1436 = vld [vmem:[%s1410 + $0xc8] sm:$0xff]
      %v1437 = vld [vmem:[%s1410 + $0xd0] sm:$0xff]
      %v1438 = vld [vmem:[%s1410 + $0xd8] sm:$0xff]
      %v1439 = vld [vmem:[%s1410 + $0xe0] sm:$0xff]
      %v1440 = vld [vmem:[%s1410 + $0xe8] sm:$0xff]
      %v1441 = vld [vmem:[%s1410 + $0xf0] sm:$0xff]
      %v1442 = vld [vmem:[%s1410 + $0xf8] sm:$0xff]
      %v1443 = vld [vmem:[%s1410 + $0x100] sm:$0xff]
      %v1444 = vld [vmem:[%s1410 + $0x108] sm:$0xff]
      %v1445 = vld [vmem:[%s1410 + $0x110] sm:$0xff]
      %v1446 = vld [vmem:[%s1410 + $0x118] sm:$0xff]
      %v1447 = vld [vmem:[%s1410 + $0x120] sm:$0xff]
      %v1448 = vld [vmem:[%s1410 + $0x128] sm:$0xff]
      %v1449 = vld [vmem:[%s1410 + $0x130] sm:$0xff]
      %v1450 = vld [vmem:[%s1410 + $0x138] sm:$0xff]
      %v1451 = vld [vmem:[%s1410 + $0x140] sm:$0xff]
      %v1452 = vld [vmem:[%s1410 + $0x148] sm:$0xff]
      %v1453 = vld [vmem:[%s1410 + $0x150] sm:$0xff]
      %v1454 = vld [vmem:[%s1410 + $0x158] sm:$0xff]
      %v1455 = vld [vmem:[%s1410 + $0x160] sm:$0xff]
      %v1456 = vld [vmem:[%s1410 + $0x168] sm:$0xff]
      %v1457 = vld [vmem:[%s1410 + $0x170] sm:$0xff]
      %v1458 = vld [vmem:[%s1410 + $0x178] sm:$0xff]
      %v1459 = vsel %vm915, %v1387, 0
      %v1461 = vsel %vm915, %v1393, 0
      %v1463 = vsel %vm915, %v1399, 0
      %v1465 = vsel %vm915, %v1405, 0
      %1467 = vmatpush.msra.mxu0 %v1441
      %1468 = vmatpush.msra.mxu0 %v1439
      %1469 = vmatpush.msra.mxu0 %v1437
      %1470 = vmatpush.msra.mxu0 %v1435
      %1471 = vmatpush.msra.mxu0 %v1433
      %1472 = vmatpush.msra.mxu0 %v1431
      %1473 = vmatpush.msra.mxu0 %v1429
      %1474 = vmatpush.msra.mxu0 %v1427
      %1475 = vmatpush.msra.mxu0 %v1425
      %1476 = vmatpush.msra.mxu0 %v1423
      %1477 = vmatpush.msra.mxu0 %v1421
      %1478 = vmatpush.msra.mxu0 %v1419
      %1479 = vmatpush.msra.mxu0 %v1417
      %1480 = vmatpush.msra.mxu0 %v1415
      %1481 = vmatpush.msra.mxu0 %v1413
      %1482 = vmatpush.msra.mxu0 %v1411
      %1483 = vmatmul.f32.gmra.mxu0 %v1384
      %v1484 = vpop.f32.mrf.mxu0
      %v1485 = vadd.f32 0.0, %v1484
      %1486 = vmatmul.f32.gmra.mxu0 %v1390
      %v1487 = vpop.f32.mrf.mxu0
      %v1488 = vadd.f32 0.0, %v1487
      %1489 = vmatmul.f32.gmra.mxu0 %v1396
      %v1490 = vpop.f32.mrf.mxu0
      %v1491 = vadd.f32 0.0, %v1490
      %1492 = vmatmul.f32.gmra.mxu0 %v1402
      %v1493 = vpop.f32.mrf.mxu0
      %v1494 = vadd.f32 0.0, %v1493
      %1495 = vdwg.mxu0
      %1496 = vmatpush.msra.mxu0 0.0
      %1497 = vmatpush.msra.mxu0 0.0
      %1498 = vmatpush.msra.mxu0 0.0
      %1499 = vmatpush.msra.mxu0 0.0
      %1500 = vmatpush.msra.mxu0 0.0
      %1501 = vmatpush.msra.mxu0 0.0
      %1502 = vmatpush.msra.mxu0 0.0
      %1503 = vmatpush.msra.mxu0 0.0
      %1504 = vmatpush.msra.mxu0 %v1457
      %1505 = vmatpush.msra.mxu0 %v1455
      %1506 = vmatpush.msra.mxu0 %v1453
      %1507 = vmatpush.msra.mxu0 %v1451
      %1508 = vmatpush.msra.mxu0 %v1449
      %1509 = vmatpush.msra.mxu0 %v1447
      %1510 = vmatpush.msra.mxu0 %v1445
      %1511 = vmatpush.msra.mxu0 %v1443
      %1512 = vmatmul.f32.gmra.mxu0 %v1459
      %v1513 = vpop.f32.mrf.mxu0
      %v1514 = vadd.f32 %v1485, %v1513
      %1515 = vmatmul.f32.gmra.mxu0 %v1461
      %v1516 = vpop.f32.mrf.mxu0
      %v1517 = vadd.f32 %v1488, %v1516
      %1518 = vmatmul.f32.gmra.mxu0 %v1463
      %v1519 = vpop.f32.mrf.mxu0
      %v1520 = vadd.f32 %v1491, %v1519
      %1521 = vmatmul.f32.gmra.mxu0 %v1465
      %v1522 = vpop.f32.mrf.mxu0
      %v1523 = vadd.f32 %v1494, %v1522
      %1524 = vdwg.mxu0
      %1525 = vmatpush.msra.mxu0 %v1442
      %1526 = vmatpush.msra.mxu0 %v1440
      %1527 = vmatpush.msra.mxu0 %v1438
      %1528 = vmatpush.msra.mxu0 %v1436
      %1529 = vmatpush.msra.mxu0 %v1434
      %1530 = vmatpush.msra.mxu0 %v1432
      %1531 = vmatpush.msra.mxu0 %v1430
      %1532 = vmatpush.msra.mxu0 %v1428
      %1533 = vmatpush.msra.mxu0 %v1426
      %1534 = vmatpush.msra.mxu0 %v1424
      %1535 = vmatpush.msra.mxu0 %v1422
      %1536 = vmatpush.msra.mxu0 %v1420
      %1537 = vmatpush.msra.mxu0 %v1418
      %1538 = vmatpush.msra.mxu0 %v1416
      %1539 = vmatpush.msra.mxu0 %v1414
      %1540 = vmatpush.msra.mxu0 %v1412
      %1541 = vmatmul.f32.gmra.mxu0 %v1384
      %v1542 = vpop.f32.mrf.mxu0
      %v1543 = vadd.f32 0.0, %v1542
      %1544 = vmatmul.f32.gmra.mxu0 %v1390
      %v1545 = vpop.f32.mrf.mxu0
      %v1546 = vadd.f32 0.0, %v1545
      %1547 = vmatmul.f32.gmra.mxu0 %v1396
      %v1548 = vpop.f32.mrf.mxu0
      %v1549 = vadd.f32 0.0, %v1548
      %1550 = vmatmul.f32.gmra.mxu0 %v1402
      %v1551 = vpop.f32.mrf.mxu0
      %v1552 = vadd.f32 0.0, %v1551
      %1553 = vdwg.mxu0
      %1554 = vmatpush.msra.mxu0 0.0
      %1555 = vmatpush.msra.mxu0 0.0
      %1556 = vmatpush.msra.mxu0 0.0
      %1557 = vmatpush.msra.mxu0 0.0
      %1558 = vmatpush.msra.mxu0 0.0
      %1559 = vmatpush.msra.mxu0 0.0
      %1560 = vmatpush.msra.mxu0 0.0
      %1561 = vmatpush.msra.mxu0 0.0
      %1562 = vmatpush.msra.mxu0 %v1458
      %1563 = vmatpush.msra.mxu0 %v1456
      %1564 = vmatpush.msra.mxu0 %v1454
      %1565 = vmatpush.msra.mxu0 %v1452
      %1566 = vmatpush.msra.mxu0 %v1450
      %1567 = vmatpush.msra.mxu0 %v1448
      %1568 = vmatpush.msra.mxu0 %v1446
      %1569 = vmatpush.msra.mxu0 %v1444
      %1570 = vmatmul.f32.gmra.mxu0 %v1459
      %v1571 = vpop.f32.mrf.mxu0
      %v1572 = vadd.f32 %v1543, %v1571
      %1573 = vmatmul.f32.gmra.mxu0 %v1461
      %v1574 = vpop.f32.mrf.mxu0
      %v1575 = vadd.f32 %v1546, %v1574
      %1576 = vmatmul.f32.gmra.mxu0 %v1463
      %v1577 = vpop.f32.mrf.mxu0
      %v1578 = vadd.f32 %v1549, %v1577
      %1579 = vmatmul.f32.gmra.mxu0 %v1465
      %v1580 = vpop.f32.mrf.mxu0
      %v1581 = vadd.f32 %v1552, %v1580
      %1582 = vdwg.mxu0
      %v1583 = vadd.f32 %v1280, %v1514
      %v1584 = vadd.f32 %v1338, %v1572
      %v1585 = vadd.f32 %v1283, %v1517
      %v1586 = vadd.f32 %v1341, %v1575
      %v1587 = vadd.f32 %v1286, %v1520
      %v1588 = vadd.f32 %v1344, %v1578
      %v1589 = vadd.f32 %v1289, %v1523
      %v1590 = vadd.f32 %v1347, %v1581
      %v1591 = vld [vmem:[#allocation2] sm:$0xf8]
      %v1592 = vld [vmem:[#allocation2 + $0x8] sm:$0xf8]
      %v1593 = vld [vmem:[#allocation2 + $0x10] sm:$0x7]
      %v1594 = vld [vmem:[#allocation2 + $0x18] sm:$0x7]
      %v1595 = vld [vmem:[#allocation2 + $0x20] sm:$0xf8]
      %v1596 = vld [vmem:[#allocation2 + $0x28] sm:$0xf8]
      %v1597 = vld [vmem:[#allocation2 + $0x30] sm:$0x7]
      %v1598 = vld [vmem:[#allocation2 + $0x38] sm:$0x7]
      %v1599 = vld [vmem:[#allocation2 + $0x40] sm:$0xf8]
      %v1600 = vld [vmem:[#allocation2 + $0x48] sm:$0xf8]
      %v1601 = vld [vmem:[#allocation2 + $0x50] sm:$0x7]
      %v1602 = vld [vmem:[#allocation2 + $0x58] sm:$0x7]
      %v1603 = vld [vmem:[#allocation2 + $0x60] sm:$0xf8]
      %v1604 = vld [vmem:[#allocation2 + $0x68] sm:$0xf8]
      %v1605 = vld [vmem:[#allocation2 + $0x70] sm:$0x7]
      %v1606 = vld [vmem:[#allocation2 + $0x78] sm:$0x7]
      %vm1623 = vcmask 1044480
      %v1624 = vrot.slane %v1591, 3
      %v1625 = vrot.slane %v1593, 3
      %v1626 = vsel %vm1623, %v1624, %v1625
      %v1627 = vrot.slane %v1592, 3
      %v1628 = vrot.slane %v1594, 3
      %v1629 = vsel %vm1623, %v1627, %v1628
      %v1630 = vrot.slane %v1595, 3
      %v1631 = vrot.slane %v1597, 3
      %v1632 = vsel %vm1623, %v1630, %v1631
      %v1633 = vrot.slane %v1596, 3
      %v1634 = vrot.slane %v1598, 3
      %v1635 = vsel %vm1623, %v1633, %v1634
      %v1636 = vrot.slane %v1599, 3
      %v1637 = vrot.slane %v1601, 3
      %v1638 = vsel %vm1623, %v1636, %v1637
      %v1639 = vrot.slane %v1600, 3
      %v1640 = vrot.slane %v1602, 3
      %v1641 = vsel %vm1623, %v1639, %v1640
      %v1642 = vrot.slane %v1603, 3
      %v1643 = vrot.slane %v1605, 3
      %v1644 = vsel %vm1623, %v1642, %v1643
      %v1645 = vrot.slane %v1604, 3
      %v1646 = vrot.slane %v1606, 3
      %v1647 = vsel %vm1623, %v1645, %v1646
      %s1652 = scalar_lea.vmem %s3, 1152
      %v1653 = vld [vmem:[%s1652] sm:$0xff]
      %v1654 = vld [vmem:[%s1652 + $0x8] sm:$0xff]
      %v1655 = vld [vmem:[%s1652 + $0x10] sm:$0xff]
      %v1656 = vld [vmem:[%s1652 + $0x18] sm:$0xff]
      %v1657 = vld [vmem:[%s1652 + $0x20] sm:$0xff]
      %v1658 = vld [vmem:[%s1652 + $0x28] sm:$0xff]
      %v1659 = vld [vmem:[%s1652 + $0x30] sm:$0xff]
      %v1660 = vld [vmem:[%s1652 + $0x38] sm:$0xff]
      %v1661 = vld [vmem:[%s1652 + $0x40] sm:$0xff]
      %v1662 = vld [vmem:[%s1652 + $0x48] sm:$0xff]
      %v1663 = vld [vmem:[%s1652 + $0x50] sm:$0xff]
      %v1664 = vld [vmem:[%s1652 + $0x58] sm:$0xff]
      %v1665 = vld [vmem:[%s1652 + $0x60] sm:$0xff]
      %v1666 = vld [vmem:[%s1652 + $0x68] sm:$0xff]
      %v1667 = vld [vmem:[%s1652 + $0x70] sm:$0xff]
      %v1668 = vld [vmem:[%s1652 + $0x78] sm:$0xff]
      %v1669 = vld [vmem:[%s1652 + $0x80] sm:$0xff]
      %v1670 = vld [vmem:[%s1652 + $0x88] sm:$0xff]
      %v1671 = vld [vmem:[%s1652 + $0x90] sm:$0xff]
      %v1672 = vld [vmem:[%s1652 + $0x98] sm:$0xff]
      %v1673 = vld [vmem:[%s1652 + $0xa0] sm:$0xff]
      %v1674 = vld [vmem:[%s1652 + $0xa8] sm:$0xff]
      %v1675 = vld [vmem:[%s1652 + $0xb0] sm:$0xff]
      %v1676 = vld [vmem:[%s1652 + $0xb8] sm:$0xff]
      %v1677 = vld [vmem:[%s1652 + $0xc0] sm:$0xff]
      %v1678 = vld [vmem:[%s1652 + $0xc8] sm:$0xff]
      %v1679 = vld [vmem:[%s1652 + $0xd0] sm:$0xff]
      %v1680 = vld [vmem:[%s1652 + $0xd8] sm:$0xff]
      %v1681 = vld [vmem:[%s1652 + $0xe0] sm:$0xff]
      %v1682 = vld [vmem:[%s1652 + $0xe8] sm:$0xff]
      %v1683 = vld [vmem:[%s1652 + $0xf0] sm:$0xff]
      %v1684 = vld [vmem:[%s1652 + $0xf8] sm:$0xff]
      %v1685 = vld [vmem:[%s1652 + $0x100] sm:$0xff]
      %v1686 = vld [vmem:[%s1652 + $0x108] sm:$0xff]
      %v1687 = vld [vmem:[%s1652 + $0x110] sm:$0xff]
      %v1688 = vld [vmem:[%s1652 + $0x118] sm:$0xff]
      %v1689 = vld [vmem:[%s1652 + $0x120] sm:$0xff]
      %v1690 = vld [vmem:[%s1652 + $0x128] sm:$0xff]
      %v1691 = vld [vmem:[%s1652 + $0x130] sm:$0xff]
      %v1692 = vld [vmem:[%s1652 + $0x138] sm:$0xff]
      %v1693 = vld [vmem:[%s1652 + $0x140] sm:$0xff]
      %v1694 = vld [vmem:[%s1652 + $0x148] sm:$0xff]
      %v1695 = vld [vmem:[%s1652 + $0x150] sm:$0xff]
      %v1696 = vld [vmem:[%s1652 + $0x158] sm:$0xff]
      %v1697 = vld [vmem:[%s1652 + $0x160] sm:$0xff]
      %v1698 = vld [vmem:[%s1652 + $0x168] sm:$0xff]
      %v1699 = vld [vmem:[%s1652 + $0x170] sm:$0xff]
      %v1700 = vld [vmem:[%s1652 + $0x178] sm:$0xff]
      %v1701 = vsel %vm915, %v1629, 0
      %v1703 = vsel %vm915, %v1635, 0
      %v1705 = vsel %vm915, %v1641, 0
      %v1707 = vsel %vm915, %v1647, 0
      %1709 = vmatpush.msra.mxu0 %v1683
      %1710 = vmatpush.msra.mxu0 %v1681
      %1711 = vmatpush.msra.mxu0 %v1679
      %1712 = vmatpush.msra.mxu0 %v1677
      %1713 = vmatpush.msra.mxu0 %v1675
      %1714 = vmatpush.msra.mxu0 %v1673
      %1715 = vmatpush.msra.mxu0 %v1671
      %1716 = vmatpush.msra.mxu0 %v1669
      %1717 = vmatpush.msra.mxu0 %v1667
      %1718 = vmatpush.msra.mxu0 %v1665
      %1719 = vmatpush.msra.mxu0 %v1663
      %1720 = vmatpush.msra.mxu0 %v1661
      %1721 = vmatpush.msra.mxu0 %v1659
      %1722 = vmatpush.msra.mxu0 %v1657
      %1723 = vmatpush.msra.mxu0 %v1655
      %1724 = vmatpush.msra.mxu0 %v1653
      %1725 = vmatmul.f32.gmra.mxu0 %v1626
      %v1726 = vpop.f32.mrf.mxu0
      %v1727 = vadd.f32 0.0, %v1726
      %1728 = vmatmul.f32.gmra.mxu0 %v1632
      %v1729 = vpop.f32.mrf.mxu0
      %v1730 = vadd.f32 0.0, %v1729
      %1731 = vmatmul.f32.gmra.mxu0 %v1638
      %v1732 = vpop.f32.mrf.mxu0
      %v1733 = vadd.f32 0.0, %v1732
      %1734 = vmatmul.f32.gmra.mxu0 %v1644
      %v1735 = vpop.f32.mrf.mxu0
      %v1736 = vadd.f32 0.0, %v1735
      %1737 = vdwg.mxu0
      %1738 = vmatpush.msra.mxu0 0.0
      %1739 = vmatpush.msra.mxu0 0.0
      %1740 = vmatpush.msra.mxu0 0.0
      %1741 = vmatpush.msra.mxu0 0.0
      %1742 = vmatpush.msra.mxu0 0.0
      %1743 = vmatpush.msra.mxu0 0.0
      %1744 = vmatpush.msra.mxu0 0.0
      %1745 = vmatpush.msra.mxu0 0.0
      %1746 = vmatpush.msra.mxu0 %v1699
      %1747 = vmatpush.msra.mxu0 %v1697
      %1748 = vmatpush.msra.mxu0 %v1695
      %1749 = vmatpush.msra.mxu0 %v1693
      %1750 = vmatpush.msra.mxu0 %v1691
      %1751 = vmatpush.msra.mxu0 %v1689
      %1752 = vmatpush.msra.mxu0 %v1687
      %1753 = vmatpush.msra.mxu0 %v1685
      %1754 = vmatmul.f32.gmra.mxu0 %v1701
      %v1755 = vpop.f32.mrf.mxu0
      %v1756 = vadd.f32 %v1727, %v1755
      %1757 = vmatmul.f32.gmra.mxu0 %v1703
      %v1758 = vpop.f32.mrf.mxu0
      %v1759 = vadd.f32 %v1730, %v1758
      %1760 = vmatmul.f32.gmra.mxu0 %v1705
      %v1761 = vpop.f32.mrf.mxu0
      %v1762 = vadd.f32 %v1733, %v1761
      %1763 = vmatmul.f32.gmra.mxu0 %v1707
      %v1764 = vpop.f32.mrf.mxu0
      %v1765 = vadd.f32 %v1736, %v1764
      %1766 = vdwg.mxu0
      %1767 = vmatpush.msra.mxu0 %v1684
      %1768 = vmatpush.msra.mxu0 %v1682
      %1769 = vmatpush.msra.mxu0 %v1680
      %1770 = vmatpush.msra.mxu0 %v1678
      %1771 = vmatpush.msra.mxu0 %v1676
      %1772 = vmatpush.msra.mxu0 %v1674
      %1773 = vmatpush.msra.mxu0 %v1672
      %1774 = vmatpush.msra.mxu0 %v1670
      %1775 = vmatpush.msra.mxu0 %v1668
      %1776 = vmatpush.msra.mxu0 %v1666
      %1777 = vmatpush.msra.mxu0 %v1664
      %1778 = vmatpush.msra.mxu0 %v1662
      %1779 = vmatpush.msra.mxu0 %v1660
      %1780 = vmatpush.msra.mxu0 %v1658
      %1781 = vmatpush.msra.mxu0 %v1656
      %1782 = vmatpush.msra.mxu0 %v1654
      %1783 = vmatmul.f32.gmra.mxu0 %v1626
      %v1784 = vpop.f32.mrf.mxu0
      %v1785 = vadd.f32 0.0, %v1784
      %1786 = vmatmul.f32.gmra.mxu0 %v1632
      %v1787 = vpop.f32.mrf.mxu0
      %v1788 = vadd.f32 0.0, %v1787
      %1789 = vmatmul.f32.gmra.mxu0 %v1638
      %v1790 = vpop.f32.mrf.mxu0
      %v1791 = vadd.f32 0.0, %v1790
      %1792 = vmatmul.f32.gmra.mxu0 %v1644
      %v1793 = vpop.f32.mrf.mxu0
      %v1794 = vadd.f32 0.0, %v1793
      %1795 = vdwg.mxu0
      %1796 = vmatpush.msra.mxu0 0.0
      %1797 = vmatpush.msra.mxu0 0.0
      %1798 = vmatpush.msra.mxu0 0.0
      %1799 = vmatpush.msra.mxu0 0.0
      %1800 = vmatpush.msra.mxu0 0.0
      %1801 = vmatpush.msra.mxu0 0.0
      %1802 = vmatpush.msra.mxu0 0.0
      %1803 = vmatpush.msra.mxu0 0.0
      %1804 = vmatpush.msra.mxu0 %v1700
      %1805 = vmatpush.msra.mxu0 %v1698
      %1806 = vmatpush.msra.mxu0 %v1696
      %1807 = vmatpush.msra.mxu0 %v1694
      %1808 = vmatpush.msra.mxu0 %v1692
      %1809 = vmatpush.msra.mxu0 %v1690
      %1810 = vmatpush.msra.mxu0 %v1688
      %1811 = vmatpush.msra.mxu0 %v1686
      %1812 = vmatmul.f32.gmra.mxu0 %v1701
      %v1813 = vpop.f32.mrf.mxu0
      %v1814 = vadd.f32 %v1785, %v1813
      %1815 = vmatmul.f32.gmra.mxu0 %v1703
      %v1816 = vpop.f32.mrf.mxu0
      %v1817 = vadd.f32 %v1788, %v1816
      %1818 = vmatmul.f32.gmra.mxu0 %v1705
      %v1819 = vpop.f32.mrf.mxu0
      %v1820 = vadd.f32 %v1791, %v1819
      %1821 = vmatmul.f32.gmra.mxu0 %v1707
      %v1822 = vpop.f32.mrf.mxu0
      %v1823 = vadd.f32 %v1794, %v1822
      %1824 = vdwg.mxu0
      %v1825 = vadd.f32 %v1583, %v1756
      %v1826 = vadd.f32 %v1584, %v1814
      %v1827 = vadd.f32 %v1585, %v1759
      %v1828 = vadd.f32 %v1586, %v1817
      %v1829 = vadd.f32 %v1587, %v1762
      %v1830 = vadd.f32 %v1588, %v1820
      %v1831 = vadd.f32 %v1589, %v1765
      %v1832 = vadd.f32 %v1590, %v1823
      %v1833 = vld [vmem:[#allocation2] sm:$0xf0]
      %v1834 = vld [vmem:[#allocation2 + $0x8] sm:$0xf0]
      %v1835 = vld [vmem:[#allocation2 + $0x10] sm:$0xf]
      %v1836 = vld [vmem:[#allocation2 + $0x18] sm:$0xf]
      %v1837 = vld [vmem:[#allocation2 + $0x20] sm:$0xf0]
      %v1838 = vld [vmem:[#allocation2 + $0x28] sm:$0xf0]
      %v1839 = vld [vmem:[#allocation2 + $0x30] sm:$0xf]
      %v1840 = vld [vmem:[#allocation2 + $0x38] sm:$0xf]
      %v1841 = vld [vmem:[#allocation2 + $0x40] sm:$0xf0]
      %v1842 = vld [vmem:[#allocation2 + $0x48] sm:$0xf0]
      %v1843 = vld [vmem:[#allocation2 + $0x50] sm:$0xf]
      %v1844 = vld [vmem:[#allocation2 + $0x58] sm:$0xf]
      %v1845 = vld [vmem:[#allocation2 + $0x60] sm:$0xf0]
      %v1846 = vld [vmem:[#allocation2 + $0x68] sm:$0xf0]
      %v1847 = vld [vmem:[#allocation2 + $0x70] sm:$0xf]
      %v1848 = vld [vmem:[#allocation2 + $0x78] sm:$0xf]
      %vm1865 = vcmask 1043456
      %v1866 = vrot.slane %v1833, 4
      %v1867 = vrot.slane %v1835, 4
      %v1868 = vsel %vm1865, %v1866, %v1867
      %v1869 = vrot.slane %v1834, 4
      %v1870 = vrot.slane %v1836, 4
      %v1871 = vsel %vm1865, %v1869, %v1870
      %v1872 = vrot.slane %v1837, 4
      %v1873 = vrot.slane %v1839, 4
      %v1874 = vsel %vm1865, %v1872, %v1873
      %v1875 = vrot.slane %v1838, 4
      %v1876 = vrot.slane %v1840, 4
      %v1877 = vsel %vm1865, %v1875, %v1876
      %v1878 = vrot.slane %v1841, 4
      %v1879 = vrot.slane %v1843, 4
      %v1880 = vsel %vm1865, %v1878, %v1879
      %v1881 = vrot.slane %v1842, 4
      %v1882 = vrot.slane %v1844, 4
      %v1883 = vsel %vm1865, %v1881, %v1882
      %v1884 = vrot.slane %v1845, 4
      %v1885 = vrot.slane %v1847, 4
      %v1886 = vsel %vm1865, %v1884, %v1885
      %v1887 = vrot.slane %v1846, 4
      %v1888 = vrot.slane %v1848, 4
      %v1889 = vsel %vm1865, %v1887, %v1888
      %s1894 = scalar_lea.vmem %s3, 1536
      %v1895 = vld [vmem:[%s1894] sm:$0xff]
      %v1896 = vld [vmem:[%s1894 + $0x8] sm:$0xff]
      %v1897 = vld [vmem:[%s1894 + $0x10] sm:$0xff]
      %v1898 = vld [vmem:[%s1894 + $0x18] sm:$0xff]
      %v1899 = vld [vmem:[%s1894 + $0x20] sm:$0xff]
      %v1900 = vld [vmem:[%s1894 + $0x28] sm:$0xff]
      %v1901 = vld [vmem:[%s1894 + $0x30] sm:$0xff]
      %v1902 = vld [vmem:[%s1894 + $0x38] sm:$0xff]
      %v1903 = vld [vmem:[%s1894 + $0x40] sm:$0xff]
      %v1904 = vld [vmem:[%s1894 + $0x48] sm:$0xff]
      %v1905 = vld [vmem:[%s1894 + $0x50] sm:$0xff]
      %v1906 = vld [vmem:[%s1894 + $0x58] sm:$0xff]
      %v1907 = vld [vmem:[%s1894 + $0x60] sm:$0xff]
      %v1908 = vld [vmem:[%s1894 + $0x68] sm:$0xff]
      %v1909 = vld [vmem:[%s1894 + $0x70] sm:$0xff]
      %v1910 = vld [vmem:[%s1894 + $0x78] sm:$0xff]
      %v1911 = vld [vmem:[%s1894 + $0x80] sm:$0xff]
      %v1912 = vld [vmem:[%s1894 + $0x88] sm:$0xff]
      %v1913 = vld [vmem:[%s1894 + $0x90] sm:$0xff]
      %v1914 = vld [vmem:[%s1894 + $0x98] sm:$0xff]
      %v1915 = vld [vmem:[%s1894 + $0xa0] sm:$0xff]
      %v1916 = vld [vmem:[%s1894 + $0xa8] sm:$0xff]
      %v1917 = vld [vmem:[%s1894 + $0xb0] sm:$0xff]
      %v1918 = vld [vmem:[%s1894 + $0xb8] sm:$0xff]
      %v1919 = vld [vmem:[%s1894 + $0xc0] sm:$0xff]
      %v1920 = vld [vmem:[%s1894 + $0xc8] sm:$0xff]
      %v1921 = vld [vmem:[%s1894 + $0xd0] sm:$0xff]
      %v1922 = vld [vmem:[%s1894 + $0xd8] sm:$0xff]
      %v1923 = vld [vmem:[%s1894 + $0xe0] sm:$0xff]
      %v1924 = vld [vmem:[%s1894 + $0xe8] sm:$0xff]
      %v1925 = vld [vmem:[%s1894 + $0xf0] sm:$0xff]
      %v1926 = vld [vmem:[%s1894 + $0xf8] sm:$0xff]
      %v1927 = vld [vmem:[%s1894 + $0x100] sm:$0xff]
      %v1928 = vld [vmem:[%s1894 + $0x108] sm:$0xff]
      %v1929 = vld [vmem:[%s1894 + $0x110] sm:$0xff]
      %v1930 = vld [vmem:[%s1894 + $0x118] sm:$0xff]
      %v1931 = vld [vmem:[%s1894 + $0x120] sm:$0xff]
      %v1932 = vld [vmem:[%s1894 + $0x128] sm:$0xff]
      %v1933 = vld [vmem:[%s1894 + $0x130] sm:$0xff]
      %v1934 = vld [vmem:[%s1894 + $0x138] sm:$0xff]
      %v1935 = vld [vmem:[%s1894 + $0x140] sm:$0xff]
      %v1936 = vld [vmem:[%s1894 + $0x148] sm:$0xff]
      %v1937 = vld [vmem:[%s1894 + $0x150] sm:$0xff]
      %v1938 = vld [vmem:[%s1894 + $0x158] sm:$0xff]
      %v1939 = vld [vmem:[%s1894 + $0x160] sm:$0xff]
      %v1940 = vld [vmem:[%s1894 + $0x168] sm:$0xff]
      %v1941 = vld [vmem:[%s1894 + $0x170] sm:$0xff]
      %v1942 = vld [vmem:[%s1894 + $0x178] sm:$0xff]
      %v1943 = vsel %vm915, %v1871, 0
      %v1945 = vsel %vm915, %v1877, 0
      %v1947 = vsel %vm915, %v1883, 0
      %v1949 = vsel %vm915, %v1889, 0
      %1951 = vmatpush.msra.mxu0 %v1925
      %1952 = vmatpush.msra.mxu0 %v1923
      %1953 = vmatpush.msra.mxu0 %v1921
      %1954 = vmatpush.msra.mxu0 %v1919
      %1955 = vmatpush.msra.mxu0 %v1917
      %1956 = vmatpush.msra.mxu0 %v1915
      %1957 = vmatpush.msra.mxu0 %v1913
      %1958 = vmatpush.msra.mxu0 %v1911
      %1959 = vmatpush.msra.mxu0 %v1909
      %1960 = vmatpush.msra.mxu0 %v1907
      %1961 = vmatpush.msra.mxu0 %v1905
      %1962 = vmatpush.msra.mxu0 %v1903
      %1963 = vmatpush.msra.mxu0 %v1901
      %1964 = vmatpush.msra.mxu0 %v1899
      %1965 = vmatpush.msra.mxu0 %v1897
      %1966 = vmatpush.msra.mxu0 %v1895
      %1967 = vmatmul.f32.gmra.mxu0 %v1868
      %v1968 = vpop.f32.mrf.mxu0
      %v1969 = vadd.f32 0.0, %v1968
      %1970 = vmatmul.f32.gmra.mxu0 %v1874
      %v1971 = vpop.f32.mrf.mxu0
      %v1972 = vadd.f32 0.0, %v1971
      %1973 = vmatmul.f32.gmra.mxu0 %v1880
      %v1974 = vpop.f32.mrf.mxu0
      %v1975 = vadd.f32 0.0, %v1974
      %1976 = vmatmul.f32.gmra.mxu0 %v1886
      %v1977 = vpop.f32.mrf.mxu0
      %v1978 = vadd.f32 0.0, %v1977
      %1979 = vdwg.mxu0
      %1980 = vmatpush.msra.mxu0 0.0
      %1981 = vmatpush.msra.mxu0 0.0
      %1982 = vmatpush.msra.mxu0 0.0
      %1983 = vmatpush.msra.mxu0 0.0
      %1984 = vmatpush.msra.mxu0 0.0
      %1985 = vmatpush.msra.mxu0 0.0
      %1986 = vmatpush.msra.mxu0 0.0
      %1987 = vmatpush.msra.mxu0 0.0
      %1988 = vmatpush.msra.mxu0 %v1941
      %1989 = vmatpush.msra.mxu0 %v1939
      %1990 = vmatpush.msra.mxu0 %v1937
      %1991 = vmatpush.msra.mxu0 %v1935
      %1992 = vmatpush.msra.mxu0 %v1933
      %1993 = vmatpush.msra.mxu0 %v1931
      %1994 = vmatpush.msra.mxu0 %v1929
      %1995 = vmatpush.msra.mxu0 %v1927
      %1996 = vmatmul.f32.gmra.mxu0 %v1943
      %v1997 = vpop.f32.mrf.mxu0
      %v1998 = vadd.f32 %v1969, %v1997
      %1999 = vmatmul.f32.gmra.mxu0 %v1945
      %v2000 = vpop.f32.mrf.mxu0
      %v2001 = vadd.f32 %v1972, %v2000
      %2002 = vmatmul.f32.gmra.mxu0 %v1947
      %v2003 = vpop.f32.mrf.mxu0
      %v2004 = vadd.f32 %v1975, %v2003
      %2005 = vmatmul.f32.gmra.mxu0 %v1949
      %v2006 = vpop.f32.mrf.mxu0
      %v2007 = vadd.f32 %v1978, %v2006
      %2008 = vdwg.mxu0
      %2009 = vmatpush.msra.mxu0 %v1926
      %2010 = vmatpush.msra.mxu0 %v1924
      %2011 = vmatpush.msra.mxu0 %v1922
      %2012 = vmatpush.msra.mxu0 %v1920
      %2013 = vmatpush.msra.mxu0 %v1918
      %2014 = vmatpush.msra.mxu0 %v1916
      %2015 = vmatpush.msra.mxu0 %v1914
      %2016 = vmatpush.msra.mxu0 %v1912
      %2017 = vmatpush.msra.mxu0 %v1910
      %2018 = vmatpush.msra.mxu0 %v1908
      %2019 = vmatpush.msra.mxu0 %v1906
      %2020 = vmatpush.msra.mxu0 %v1904
      %2021 = vmatpush.msra.mxu0 %v1902
      %2022 = vmatpush.msra.mxu0 %v1900
      %2023 = vmatpush.msra.mxu0 %v1898
      %2024 = vmatpush.msra.mxu0 %v1896
      %2025 = vmatmul.f32.gmra.mxu0 %v1868
      %v2026 = vpop.f32.mrf.mxu0
      %v2027 = vadd.f32 0.0, %v2026
      %2028 = vmatmul.f32.gmra.mxu0 %v1874
      %v2029 = vpop.f32.mrf.mxu0
      %v2030 = vadd.f32 0.0, %v2029
      %2031 = vmatmul.f32.gmra.mxu0 %v1880
      %v2032 = vpop.f32.mrf.mxu0
      %v2033 = vadd.f32 0.0, %v2032
      %2034 = vmatmul.f32.gmra.mxu0 %v1886
      %v2035 = vpop.f32.mrf.mxu0
      %v2036 = vadd.f32 0.0, %v2035
      %2037 = vdwg.mxu0
      %2038 = vmatpush.msra.mxu0 0.0
      %2039 = vmatpush.msra.mxu0 0.0
      %2040 = vmatpush.msra.mxu0 0.0
      %2041 = vmatpush.msra.mxu0 0.0
      %2042 = vmatpush.msra.mxu0 0.0
      %2043 = vmatpush.msra.mxu0 0.0
      %2044 = vmatpush.msra.mxu0 0.0
      %2045 = vmatpush.msra.mxu0 0.0
      %2046 = vmatpush.msra.mxu0 %v1942
      %2047 = vmatpush.msra.mxu0 %v1940
      %2048 = vmatpush.msra.mxu0 %v1938
      %2049 = vmatpush.msra.mxu0 %v1936
      %2050 = vmatpush.msra.mxu0 %v1934
      %2051 = vmatpush.msra.mxu0 %v1932
      %2052 = vmatpush.msra.mxu0 %v1930
      %2053 = vmatpush.msra.mxu0 %v1928
      %2054 = vmatmul.f32.gmra.mxu0 %v1943
      %v2055 = vpop.f32.mrf.mxu0
      %v2056 = vadd.f32 %v2027, %v2055
      %2057 = vmatmul.f32.gmra.mxu0 %v1945
      %v2058 = vpop.f32.mrf.mxu0
      %v2059 = vadd.f32 %v2030, %v2058
      %2060 = vmatmul.f32.gmra.mxu0 %v1947
      %v2061 = vpop.f32.mrf.mxu0
      %v2062 = vadd.f32 %v2033, %v2061
      %2063 = vmatmul.f32.gmra.mxu0 %v1949
      %v2064 = vpop.f32.mrf.mxu0
      %v2065 = vadd.f32 %v2036, %v2064
      %2066 = vdwg.mxu0
      %v2067 = vadd.f32 %v1825, %v1998
      %v2068 = vadd.f32 %v1826, %v2056
      %v2069 = vadd.f32 %v1827, %v2001
      %v2070 = vadd.f32 %v1828, %v2059
      %v2071 = vadd.f32 %v1829, %v2004
      %v2072 = vadd.f32 %v1830, %v2062
      %v2073 = vadd.f32 %v1831, %v2007
      %v2074 = vadd.f32 %v1832, %v2065
      %v2075 = vld [vmem:[%s4] sm:$0x3]
      %v2077 = vperm.slane %v2075, 0
      %v2078 = vperm.slane %v2075, 1
      %v2081 = vadd.f32 %v2067, %v2077
      %v2082 = vadd.f32 %v2068, %v2078
      %v2083 = vadd.f32 %v2069, %v2077
      %v2084 = vadd.f32 %v2070, %v2078
      %v2085 = vadd.f32 %v2071, %v2077
      %v2086 = vadd.f32 %v2072, %v2078
      %v2087 = vadd.f32 %v2073, %v2077
      %v2088 = vadd.f32 %v2074, %v2078
      %v2089 = vmax.f32 %v2081, 0.0
      %v2090 = vmax.f32 %v2082, 0.0
      %v2091 = vmax.f32 %v2083, 0.0
      %v2092 = vmax.f32 %v2084, 0.0
      %v2093 = vmax.f32 %v2085, 0.0
      %v2094 = vmax.f32 %v2086, 0.0
      %v2095 = vmax.f32 %v2087, 0.0
      %v2096 = vmax.f32 %v2088, 0.0
      %2097 = vst [vmem:[%s231] sm:$0xff] %v2089
      %2098 = vst [vmem:[%s231 + $0x8] sm:$0xff] %v2090
      %2099 = vst [vmem:[%s231 + $0x10] sm:$0xff] %v2091
      %2100 = vst [vmem:[%s231 + $0x18] sm:$0xff] %v2092
      %2101 = vst [vmem:[%s231 + $0x20] sm:$0xff] %v2093
      %2102 = vst [vmem:[%s231 + $0x28] sm:$0xff] %v2094
      %2103 = vst [vmem:[%s231 + $0x30] sm:$0xff] %v2095
      %2104 = vst [vmem:[%s231 + $0x38] sm:$0xff] %v2096
      %s2105 = smul.u32 4, %s16
      %p2106 = scmp.lt.s32.totalorder %s2105, 7
      %s2107 = scalar_select %p2106, %s2105, 7
      %s2108 = smul.addr %s2107, 2
      %s2109 = smul.addr %s2108, 8
      %s2110 = scalar_lea.vmem %s5, %s2109
      // Predicated region
      $region41: #{conv_preprocessing_forward.1} parent=39 // pred_check
        %p2111 = pneg %p144
      $region42: #{conv_preprocessing_forward.1} parent=39 // pred_check_branch
        %2113 = sbr.rel (%p2111) target = $region44
      $region43: #{conv_preprocessing_forward.1} parent=39 // pred_region
        %s2114 = smul.u32 4, %s16
      $region44: #{conv_preprocessing_forward.1} parent=39 // pred_fallthru
        _
    $region40: #{conv_preprocessing_forward.1} parent=5 // pred_fallthru
      _
    %p2115 = scmp.le.s32.totalorder 2, %s11
    // Predicated region
    $region45: #{conv_preprocessing_forward.1} parent=5 // pred_check
      %p2116 = pneg %p2115
    $region46: #{conv_preprocessing_forward.1} parent=5 // pred_check_branch
      %2118 = sbr.rel (%p2116) target = $region48
    $region47: #{conv_preprocessing_forward.1} parent=5 // pred_region
      %s2119 = ssub.s32 %s11, 2
      // Predicated region
      $region49: #{conv_preprocessing_forward.1} parent=47 // pred_check
        %p2120 = pneg %p150
      $region50: #{conv_preprocessing_forward.1} parent=47 // pred_check_branch
        %2122 = sbr.rel (%p2120) target = $region52
      $region51: #{conv_preprocessing_forward.1} parent=47 // pred_region
        %s2123 = smul.u32 4, %s17
        %p2124 = scmp.lt.s32.totalorder %s2123, 7
        %s2125 = scalar_select %p2124, %s2123, 7
        %s2126 = smul.addr %s2125, 2
        %s2127 = smul.addr %s2126, 8
        %s2128 = scalar_lea.vmem %s5, %s2127
      $region52: #{conv_preprocessing_forward.1} parent=47 // pred_fallthru
        _
    $region48: #{conv_preprocessing_forward.1} parent=5 // pred_fallthru
      _
  $region6: #{conv_preprocessing_forward.1} parent=0 // loop_footer
    %s15 = sadd.s32 1, %s11
  $region7: #{conv_preprocessing_forward.1} parent=0 // loop_footer_branch
    %10 = sbr.rel target = $region3
  $region8: #{conv_preprocessing_forward.1} parent=0 // loop_exit
    _

</llo_original>
